<compile_context>
chip_gen: v5e
topology: v5e:2x2
jax: 0.10.0
libtpu: 0.0.40
codegen_flags: <defaults>
</compile_context>

<pallas_src>
import functools
import math

import jax
import jax.numpy as jnp
from jax.experimental import pallas as pl
from jax.experimental.pallas import tpu as pltpu

# ----------------------------------------------------------------------------
# small synthetic hyper-params (bert-base stand-in)
# ----------------------------------------------------------------------------
VOCAB = 50
MAX_POS = 16
TYPE_VOCAB = 2
HIDDEN = 32
NUM_HEADS = 2
HEAD_DIM = HIDDEN // NUM_HEADS
FFN = 64
NUM_LAYERS = 2
NUM_CLASSES = 3
LN_EPS = 1e-12


# ----------------------------------------------------------------------------
# helpers (usable both in-kernel and in the pure-JAX reference)
# ----------------------------------------------------------------------------
def _layernorm(x, g, b):
    mu = jnp.mean(x, axis=-1, keepdims=True)
    xc = x - mu
    var = jnp.mean(xc * xc, axis=-1, keepdims=True)
    return xc * jax.lax.rsqrt(var + LN_EPS) * g + b


def _gelu(x):
    # tanh approximation (EUP friendly).
    # TODO(synk): reference BERT uses the exact erf GELU; tiny numeric drift.
    c = math.sqrt(2.0 / math.pi)
    return 0.5 * x * (1.0 + jnp.tanh(c * (x + 0.044715 * x * x * x)))


# ----------------------------------------------------------------------------
# the fused kernel: one grid step == one sentence pair (A and B together)
# ----------------------------------------------------------------------------
def _siamese_bert_kernel(
        x_ref, lens_ref, emb_g_ref, emb_b_ref,
        wqkv_ref, bqkv_ref, wo_ref, bo_ref,
        ln1_g_ref, ln1_b_ref, w1_ref, b1_ref,
        w2_ref, b2_ref, ln2_g_ref, ln2_b_ref,
        clsw_ref, clsb_ref,
        cls_ref, logits_ref,
        *, n_layers, n_heads, head_dim, seq):
    H = n_heads * head_dim
    m = 2 * seq                               # rows in this block: sent A + sent B
    scale = 1.0 / math.sqrt(head_dim)

    # ---- embedding LayerNorm ------------------------------------------------
    x = _layernorm(x_ref[...].astype(jnp.float32), emb_g_ref[...], emb_b_ref[...])

    # additive key mask built in-kernel from the two sequence lengths: (2,1,S).
    kpos = jax.lax.broadcasted_iota(jnp.int32, (2, 1, seq), 2)
    lens = lens_ref[...]                              # (2, 1) int32
    mask = jnp.where(kpos < lens[:, :, None], 0.0, -1e9)

    # ---- transformer layers (post-LN, as in BERT) ---------------------------
    for l in range(n_layers):
        # fused QKV projection: one (m, H) x (H, 3H) MXU pass.
        qkv = (jnp.dot(x, wqkv_ref[l], preferred_element_type=jnp.float32)
               + bqkv_ref[l])

        wo = wo_ref[l]
        attn_out = bo_ref[l].astype(jnp.float32)          # (1, H), broadcasts
        for h in range(n_heads):
            q0 = h * head_dim
            qh = qkv[:, q0:q0 + head_dim].reshape(2, seq, head_dim)
            kh = qkv[:, H + q0:H + q0 + head_dim].reshape(2, seq, head_dim)
            vh = qkv[:, 2 * H + q0:2 * H + q0 + head_dim].reshape(2, seq, head_dim)

            s = jnp.einsum("bqd,bkd->bqk", qh, kh,
                           preferred_element_type=jnp.float32) * scale
            s = s + mask
            s = s - jnp.max(s, axis=-1, keepdims=True)
            p = jnp.exp(s)
            p = p * pl.reciprocal(jnp.sum(p, axis=-1, keepdims=True), approx=True)
            ctx = jnp.einsum("bqk,bkd->bqd", p, vh,
                             preferred_element_type=jnp.float32)
            # fold this head's slice of the output projection in here.
            attn_out = attn_out + jnp.dot(
                ctx.reshape(m, head_dim), wo[q0:q0 + head_dim, :],
                preferred_element_type=jnp.float32)

        # residual add fused into the LayerNorm.
        x = _layernorm(x + attn_out, ln1_g_ref[l], ln1_b_ref[l])

        ff = _gelu(jnp.dot(x, w1_ref[l], preferred_element_type=jnp.float32)
                   + b1_ref[l])
        ff = jnp.dot(ff, w2_ref[l], preferred_element_type=jnp.float32) + b2_ref[l]
        x = _layernorm(x + ff, ln2_g_ref[l], ln2_b_ref[l])

    # ---- CLS embeddings + fused siamese classifier --------------------------
    a = x[0:1, :]                      # CLS token of sentence A   (1, H)
    b = x[seq:seq + 1, :]              # CLS token of sentence B   (1, H)
    d = jnp.abs(a - b)
    w = clsw_ref[...].astype(jnp.float32)          # (3H, C), split along rows
    logits = (jnp.dot(a, w[0:H], preferred_element_type=jnp.float32)
              + jnp.dot(b, w[H:2 * H], preferred_element_type=jnp.float32)
              + jnp.dot(d, w[2 * H:3 * H], preferred_element_type=jnp.float32)
              + clsb_ref[...])

    cls_ref[0:1, :] = a.astype(cls_ref.dtype)
    cls_ref[1:2, :] = b.astype(cls_ref.dtype)
    logits_ref[...] = logits.astype(logits_ref.dtype)


def fused_siamese_encoder(packed, x_pairs, lens_pairs):
    """x_pairs: (B, 2*S, H) pre-LN embeddings (A rows then B rows per pair);
    lens_pairs: (B, 2, 1) int32 sequence lengths.  Returns (a_emb, b_emb, logits)."""
    B, M2, H = x_pairs.shape
    S = M2 // 2
    C = packed["cls_w"].shape[1]

    kernel = functools.partial(
        _siamese_bert_kernel,
        n_layers=NUM_LAYERS, n_heads=NUM_HEADS, head_dim=HEAD_DIM, seq=S)

    def pair_spec(trailing):
        # one block per pair along the leading (squeezed) axis.
        return pl.BlockSpec((None,) + trailing,
                            lambda i, _t=trailing: (i,) + (0,) * len(_t))

    def const_spec(shape):
        # whole-array block, same index every step -> stays resident in VMEM.
        return pl.BlockSpec(shape, lambda i, _s=shape: (0,) * len(_s))

    args = (
        x_pairs, lens_pairs,
        packed["emb_ln_g"], packed["emb_ln_b"],
        packed["wqkv"], packed["bqkv"], packed["wo"], packed["bo"],
        packed["ln1_g"], packed["ln1_b"], packed["w1"], packed["b1"],
        packed["w2"], packed["b2"], packed["ln2_g"], packed["ln2_b"],
        packed["cls_w"], packed["cls_b"],
    )
    in_specs = ([pair_spec((M2, H)), pair_spec((2, 1))]
                + [const_spec(a.shape) for a in args[2:]])
    out_shape = (
        jax.ShapeDtypeStruct((B, 2, H), x_pairs.dtype),   # [CLS_A, CLS_B] per pair
        jax.ShapeDtypeStruct((B, 1, C), x_pairs.dtype),
    )
    out_specs = (pair_spec((2, H)), pair_spec((1, C)))

    cls, logits = pl.pallas_call(
        kernel,
        out_shape=out_shape,
        grid=(B,),
        in_specs=in_specs,
        out_specs=out_specs,
        compiler_params=pltpu.CompilerParams(
            dimension_semantics=("parallel",)),   # shards pairs across v7x TCs
    )(*args)
    return cls[:, 0, :], cls[:, 1, :], logits[:, 0, :]


# ----------------------------------------------------------------------------
# model glue (plain JAX): embedding gather, argmax
# ----------------------------------------------------------------------------
def _embed_pairs(packed, ids, segs):
    """ids/segs: (B, 2, S) -> (B, 2*S, H) pre-LN embedding sums."""
    B, _, S = ids.shape
    # TODO(synk): embedding lookup stays in XLA (no clean Pallas equivalent
    # short of a manual DMA gather, pointless at these sizes).
    x = (packed["word_emb"][ids]
         + packed["seg_emb"][segs]
         + packed["pos_emb"][:S][None, None, :, :])              # (B, 2, S, H)
    return x.reshape(B, 2 * S, HIDDEN).astype(jnp.float32)


def siamese_bert_forward(packed,
                         sent_a_input_ids, sent_a_seq_len, sent_a_segment_ids,
                         sent_b_input_ids, sent_b_seq_len, sent_b_segment_ids):
    B, S = sent_a_input_ids.shape
    # interleave the two sentences of each pair along a new axis -> (B, 2, S)
    ids = jnp.stack([sent_a_input_ids, sent_b_input_ids], axis=1)
    segs = jnp.stack([sent_a_segment_ids, sent_b_segment_ids], axis=1)
    lens = jnp.stack([sent_a_seq_len, sent_b_seq_len], axis=1)      # (B, 2)

    x = _embed_pairs(packed, ids, segs)
    lens_pairs = lens.astype(jnp.int32)[:, :, None]                 # (B, 2, 1)

    a_emb, b_emb, logits = fused_siamese_encoder(packed, x, lens_pairs)
    preds = jnp.argmax(logits, axis=-1)
    return a_emb, b_emb, logits, preds


# ----------------------------------------------------------------------------
# pure-JAX reference (same math, exact softmax) for a correctness check
# ----------------------------------------------------------------------------
def reference_forward(packed, ids, segs, lens):
    B, _, S = ids.shape
    x = _embed_pairs(packed, ids, segs).reshape(B * 2, S, HIDDEN)
    lens_f = lens.reshape(B * 2)
    mask = jnp.where(jnp.arange(S)[None, :] < lens_f[:, None], 0.0, -1e9)
    mask = mask[:, None, None, :]                                   # (B2,1,1,S)

    x = _layernorm(x, packed["emb_ln_g"][0], packed["emb_ln_b"][0])
    for l in range(NUM_LAYERS):
        qkv = (jnp.dot(x, packed["wqkv"][l], precision="highest")
               + packed["bqkv"][l][0])
        q, k, v = jnp.split(qkv, 3, axis=-1)
        to_h = lambda t: t.reshape(B * 2, S, NUM_HEADS, HEAD_DIM).transpose(0, 2, 1, 3)
        qh, kh, vh = to_h(q), to_h(k), to_h(v)
        s = (jnp.einsum("bhqd,bhkd->bhqk", qh, kh, precision="highest")
             / math.sqrt(HEAD_DIM)) + mask
        p = jax.nn.softmax(s, axis=-1)
        ctx = jnp.einsum("bhqk,bhkd->bhqd", p, vh, precision="highest")
        ctx = ctx.transpose(0, 2, 1, 3).reshape(B * 2, S, HIDDEN)
        attn = jnp.dot(ctx, packed["wo"][l], precision="highest") + packed["bo"][l][0]
        x = _layernorm(x + attn, packed["ln1_g"][l][0], packed["ln1_b"][l][0])
        ff = _gelu(jnp.dot(x, packed["w1"][l], precision="highest") + packed["b1"][l][0])
        ff = jnp.dot(ff, packed["w2"][l], precision="highest") + packed["b2"][l][0]
        x = _layernorm(x + ff, packed["ln2_g"][l][0], packed["ln2_b"][l][0])

    cls = x[:, 0, :].reshape(B, 2, HIDDEN)
    a, b = cls[:, 0, :], cls[:, 1, :]
    feats = jnp.concatenate([a, b, jnp.abs(a - b)], axis=-1)
    logits = jnp.dot(feats, packed["cls_w"], precision="highest") + packed["cls_b"][0]
    return a, b, logits


# ----------------------------------------------------------------------------
# deterministic parameter init + packing (stack per-layer weights)
# ----------------------------------------------------------------------------
def init_params(key):
    keys = iter(jax.random.split(key, 128))

    def nrm(shape):
        return 0.02 * jax.random.normal(next(keys), shape, jnp.float32)

    layers = []
    for _ in range(NUM_LAYERS):
        layers.append({
            "wq": nrm((HIDDEN, HIDDEN)), "bq": jnp.zeros((HIDDEN,), jnp.float32),
            "wk": nrm((HIDDEN, HIDDEN)), "bk": jnp.zeros((HIDDEN,), jnp.float32),
            "wv": nrm((HIDDEN, HIDDEN)), "bv": jnp.zeros((HIDDEN,), jnp.float32),
            "wo": nrm((HIDDEN, HIDDEN)), "bo": jnp.zeros((HIDDEN,), jnp.float32),
            "ln1_g": jnp.ones((HIDDEN,), jnp.float32),
            "ln1_b": jnp.zeros((HIDDEN,), jnp.float32),
            "w1": nrm((HIDDEN, FFN)), "b1": jnp.zeros((FFN,), jnp.float32),
            "w2": nrm((FFN, HIDDEN)), "b2": jnp.zeros((HIDDEN,), jnp.float32),
            "ln2_g": jnp.ones((HIDDEN,), jnp.float32),
            "ln2_b": jnp.zeros((HIDDEN,), jnp.float32),
        })
    return {
        "word_emb": nrm((VOCAB, HIDDEN)),
        "pos_emb": nrm((MAX_POS, HIDDEN)),
        "seg_emb": nrm((TYPE_VOCAB, HIDDEN)),
        "emb_ln_g": jnp.ones((HIDDEN,), jnp.float32),
        "emb_ln_b": jnp.zeros((HIDDEN,), jnp.float32),
        "layers": layers,
        "cls_w": nrm((3 * HIDDEN, NUM_CLASSES)),
        "cls_b": jnp.zeros((NUM_CLASSES,), jnp.float32),
    }


def pack_params(params):
    """Stack per-layer weights (and fuse wq|wk|wv) so the whole encoder can be
    passed to a single pallas_call and stay VMEM-resident."""
    L = params["layers"]
    row = lambda v: v.reshape(1, -1)

    def stack(fn):
        return jnp.stack([fn(p) for p in L], axis=0)

    return {
        "word_emb": params["word_emb"],
        "pos_emb": params["pos_emb"],
        "seg_emb": params["seg_emb"],
        "emb_ln_g": row(params["emb_ln_g"]),
        "emb_ln_b": row(params["emb_ln_b"]),
        "wqkv": stack(lambda p: jnp.concatenate([p["wq"], p["wk"], p["wv"]], axis=1)),
        "bqkv": stack(lambda p: row(jnp.concatenate([p["bq"], p["bk"], p["bv"]]))),
        "wo": stack(lambda p: p["wo"]),
        "bo": stack(lambda p: row(p["bo"])),
        "ln1_g": stack(lambda p: row(p["ln1_g"])),
        "ln1_b": stack(lambda p: row(p["ln1_b"])),
        "w1": stack(lambda p: p["w1"]),
        "b1": stack(lambda p: row(p["b1"])),
        "w2": stack(lambda p: p["w2"]),
        "b2": stack(lambda p: row(p["b2"])),
        "ln2_g": stack(lambda p: row(p["ln2_g"])),
        "ln2_b": stack(lambda p: row(p["ln2_b"])),
        "cls_w": params["cls_w"],
        "cls_b": row(params["cls_b"]),
    }


# ----------------------------------------------------------------------------
if __name__ == "__main__":
    B, S = 2, 8
    key = jax.random.PRNGKey(0)
    k_param, k_a, k_b = jax.random.split(key, 3)

    packed = pack_params(init_params(k_param))

    sent_a_input_ids = jax.random.randint(k_a, (B, S), 0, VOCAB, dtype=jnp.int32)
    sent_b_input_ids = jax.random.randint(k_b, (B, S), 0, VOCAB, dtype=jnp.int32)
    sent_a_seq_len = jnp.array([S, 5], dtype=jnp.int32)
    sent_b_seq_len = jnp.array([6, S], dtype=jnp.int32)
    sent_a_segment_ids = jnp.zeros((B, S), dtype=jnp.int32)
    sent_b_segment_ids = jnp.concatenate(
        [jnp.zeros((B, S // 2), jnp.int32), jnp.ones((B, S - S // 2), jnp.int32)],
        axis=1)

    fwd = jax.jit(siamese_bert_forward)
    a_emb, b_emb, logits, preds = fwd(packed,
                                      sent_a_input_ids, sent_a_seq_len, sent_a_segment_ids,
                                      sent_b_input_ids, sent_b_seq_len, sent_b_segment_ids)
    jax.block_until_ready((a_emb, b_emb, logits, preds))

    assert a_emb.shape == (B, HIDDEN)
    assert b_emb.shape == (B, HIDDEN)
    assert logits.shape == (B, NUM_CLASSES)
    assert preds.shape == (B,)

    # correctness check against a pure-JAX reference (loose tol covers the
    # approx-reciprocal softmax and matmul accumulation-order differences).
    ids = jnp.stack([sent_a_input_ids, sent_b_input_ids], axis=1)
    segs = jnp.stack([sent_a_segment_ids, sent_b_segment_ids], axis=1)
    lens = jnp.stack([sent_a_seq_len, sent_b_seq_len], axis=1)
    ra, rb, rl = reference_forward(packed, ids, segs, lens)
    assert jnp.allclose(a_emb, ra, rtol=5e-2, atol=5e-3)
    assert jnp.allclose(b_emb, rb, rtol=5e-2, atol=5e-3)
    assert jnp.allclose(logits, rl, rtol=5e-2, atol=5e-3)

    print("KERNEL_OK")
</pallas_src>

<mosaic_0001>
module attributes {stable_mosaic.version = 11 : i64} {
  func.func @_siamese_bert_kernel(%arg0: i32, %arg1: memref<1x16x32xf32, #tpu.memory_space<vmem>>, %arg2: memref<1x2x1xi32, #tpu.memory_space<vmem>>, %arg3: memref<1x32xf32, #tpu.memory_space<vmem>>, %arg4: memref<1x32xf32, #tpu.memory_space<vmem>>, %arg5: memref<2x32x96xf32, #tpu.memory_space<vmem>>, %arg6: memref<2x1x96xf32, #tpu.memory_space<vmem>>, %arg7: memref<2x32x32xf32, #tpu.memory_space<vmem>>, %arg8: memref<2x1x32xf32, #tpu.memory_space<vmem>>, %arg9: memref<2x1x32xf32, #tpu.memory_space<vmem>>, %arg10: memref<2x1x32xf32, #tpu.memory_space<vmem>>, %arg11: memref<2x32x64xf32, #tpu.memory_space<vmem>>, %arg12: memref<2x1x64xf32, #tpu.memory_space<vmem>>, %arg13: memref<2x64x32xf32, #tpu.memory_space<vmem>>, %arg14: memref<2x1x32xf32, #tpu.memory_space<vmem>>, %arg15: memref<2x1x32xf32, #tpu.memory_space<vmem>>, %arg16: memref<2x1x32xf32, #tpu.memory_space<vmem>>, %arg17: memref<96x3xf32, #tpu.memory_space<vmem>>, %arg18: memref<1x3xf32, #tpu.memory_space<vmem>>, %arg19: memref<1x2x32xf32, #tpu.memory_space<vmem>>, %arg20: memref<1x1x3xf32, #tpu.memory_space<vmem>>) attributes {dimension_semantics = [#tpu.dimension_semantics<parallel>], iteration_bounds = array<i64: 2>, scalar_prefetch = 0 : i64, scratch_operands = 0 : i64, tpu.core_type = #tpu.core_type<tc>, window_params = [{transform_indices = @transform_0, window_bounds = array<i64: 1, 16, 32>}, {transform_indices = @transform_1, window_bounds = array<i64: 1, 2, 1>}, {pipeline_mode = #tpu.pipeline_mode<synchronous>, transform_indices = @transform_2, window_bounds = array<i64: 1, 32>}, {pipeline_mode = #tpu.pipeline_mode<synchronous>, transform_indices = @transform_3, window_bounds = array<i64: 1, 32>}, {pipeline_mode = #tpu.pipeline_mode<synchronous>, transform_indices = @transform_4, window_bounds = array<i64: 2, 32, 96>}, {pipeline_mode = #tpu.pipeline_mode<synchronous>, transform_indices = @transform_5, window_bounds = array<i64: 2, 1, 96>}, {pipeline_mode = #tpu.pipeline_mode<synchronous>, transform_indices = @transform_6, window_bounds = array<i64: 2, 32, 32>}, {pipeline_mode = #tpu.pipeline_mode<synchronous>, transform_indices = @transform_7, window_bounds = array<i64: 2, 1, 32>}, {pipeline_mode = #tpu.pipeline_mode<synchronous>, transform_indices = @transform_8, window_bounds = array<i64: 2, 1, 32>}, {pipeline_mode = #tpu.pipeline_mode<synchronous>, transform_indices = @transform_9, window_bounds = array<i64: 2, 1, 32>}, {pipeline_mode = #tpu.pipeline_mode<synchronous>, transform_indices = @transform_10, window_bounds = array<i64: 2, 32, 64>}, {pipeline_mode = #tpu.pipeline_mode<synchronous>, transform_indices = @transform_11, window_bounds = array<i64: 2, 1, 64>}, {pipeline_mode = #tpu.pipeline_mode<synchronous>, transform_indices = @transform_12, window_bounds = array<i64: 2, 64, 32>}, {pipeline_mode = #tpu.pipeline_mode<synchronous>, transform_indices = @transform_13, window_bounds = array<i64: 2, 1, 32>}, {pipeline_mode = #tpu.pipeline_mode<synchronous>, transform_indices = @transform_14, window_bounds = array<i64: 2, 1, 32>}, {pipeline_mode = #tpu.pipeline_mode<synchronous>, transform_indices = @transform_15, window_bounds = array<i64: 2, 1, 32>}, {pipeline_mode = #tpu.pipeline_mode<synchronous>, transform_indices = @transform_16, window_bounds = array<i64: 96, 3>}, {pipeline_mode = #tpu.pipeline_mode<synchronous>, transform_indices = @transform_17, window_bounds = array<i64: 1, 3>}, {transform_indices = @transform_18, window_bounds = array<i64: 1, 2, 32>}, {transform_indices = @transform_19, window_bounds = array<i64: 1, 1, 3>}]} {
    %c0 = arith.constant 0 : index
    %c0_0 = arith.constant 0 : index
    %c0_1 = arith.constant 0 : index
    %0 = vector.load %arg1[%c0, %c0_0, %c0_1] : memref<1x16x32xf32, #tpu.memory_space<vmem>>, vector<1x16x32xf32>
    %1 = vector.shape_cast %0 : vector<1x16x32xf32> to vector<16x32xf32>
    %c0_2 = arith.constant 0 : index
    %c0_3 = arith.constant 0 : index
    %2 = vector.load %arg3[%c0_2, %c0_3] : memref<1x32xf32, #tpu.memory_space<vmem>>, vector<1x32xf32>
    %c0_4 = arith.constant 0 : index
    %c0_5 = arith.constant 0 : index
    %3 = vector.load %arg4[%c0_4, %c0_5] : memref<1x32xf32, #tpu.memory_space<vmem>>, vector<1x32xf32>
    %cst = arith.constant dense<0.000000e+00> : vector<16xf32>
    %4 = vector.multi_reduction <add>, %1, %cst [1] : vector<16x32xf32> to vector<16xf32>
    %5 = vector.shape_cast %4 : vector<16xf32> to vector<16x1xf32>
    %cst_6 = arith.constant 3.200000e+01 : f32
    %6 = vector.broadcast %cst_6 : f32 to vector<16x1xf32>
    %7 = arith.divf %5, %6 : vector<16x1xf32>
    %8 = vector.broadcast %7 : vector<16x1xf32> to vector<16x32xf32>
    %9 = arith.subf %1, %8 : vector<16x32xf32>
    %10 = arith.mulf %9, %9 : vector<16x32xf32>
    %cst_7 = arith.constant dense<0.000000e+00> : vector<16xf32>
    %11 = vector.multi_reduction <add>, %10, %cst_7 [1] : vector<16x32xf32> to vector<16xf32>
    %12 = vector.shape_cast %11 : vector<16xf32> to vector<16x1xf32>
    %cst_8 = arith.constant 3.200000e+01 : f32
    %13 = vector.broadcast %cst_8 : f32 to vector<16x1xf32>
    %14 = arith.divf %12, %13 : vector<16x1xf32>
    %cst_9 = arith.constant 9.99999996E-13 : f32
    %15 = vector.broadcast %cst_9 : f32 to vector<16x1xf32>
    %16 = arith.addf %14, %15 : vector<16x1xf32>
    %17 = math.rsqrt %16 : vector<16x1xf32>
    %18 = vector.broadcast %17 : vector<16x1xf32> to vector<16x32xf32>
    %19 = arith.mulf %9, %18 : vector<16x32xf32>
    %20 = vector.broadcast %2 : vector<1x32xf32> to vector<16x32xf32>
    %21 = arith.mulf %19, %20 : vector<16x32xf32>
    %22 = vector.broadcast %3 : vector<1x32xf32> to vector<16x32xf32>
    %23 = arith.addf %21, %22 : vector<16x32xf32>
    %24 = tpu.iota {dimensions = array<i32: 2>} : vector<2x1x8xi32>
    %c0_10 = arith.constant 0 : index
    %c0_11 = arith.constant 0 : index
    %c0_12 = arith.constant 0 : index
    %25 = vector.load %arg2[%c0_10, %c0_11, %c0_12] : memref<1x2x1xi32, #tpu.memory_space<vmem>>, vector<1x2x1xi32>
    %26 = vector.shape_cast %25 : vector<1x2x1xi32> to vector<2x1xi32>
    %27 = vector.shape_cast %26 : vector<2x1xi32> to vector<2x1x1xi32>
    %28 = vector.broadcast %27 : vector<2x1x1xi32> to vector<2x1x8xi32>
    %29 = arith.cmpi slt, %24, %28 : vector<2x1x8xi32>
    %cst_13 = arith.constant 0.000000e+00 : f32
    %cst_14 = arith.constant -1.000000e+09 : f32
    %30 = vector.broadcast %cst_13 : f32 to vector<2x1x8xf32>
    %31 = vector.broadcast %cst_14 : f32 to vector<2x1x8xf32>
    %32 = arith.select %29, %30, %31 : vector<2x1x8xi1>, vector<2x1x8xf32>
    %c0_15 = arith.constant 0 : index
    %c0_16 = arith.constant 0 : index
    %c0_17 = arith.constant 0 : index
    %33 = vector.load %arg5[%c0_15, %c0_16, %c0_17] : memref<2x32x96xf32, #tpu.memory_space<vmem>>, vector<1x32x96xf32>
    %34 = vector.shape_cast %33 : vector<1x32x96xf32> to vector<32x96xf32>
    %cst_18 = arith.constant dense<0.000000e+00> : vector<16x96xf32>
    %35 = tpu.matmul %23, %34, %cst_18 {dimension_numbers = #tpu.dot_dimension_numbers<[1], [0], [0], [1], [0, 0, 1, 1], [], []>} : vector<16x32xf32>, vector<32x96xf32>, vector<16x96xf32> -> vector<16x96xf32>
    %c0_19 = arith.constant 0 : index
    %c0_20 = arith.constant 0 : index
    %c0_21 = arith.constant 0 : index
    %36 = vector.load %arg6[%c0_19, %c0_20, %c0_21] : memref<2x1x96xf32, #tpu.memory_space<vmem>>, vector<1x1x96xf32>
    %37 = vector.shape_cast %36 : vector<1x1x96xf32> to vector<1x96xf32>
    %38 = vector.broadcast %37 : vector<1x96xf32> to vector<16x96xf32>
    %39 = arith.addf %35, %38 : vector<16x96xf32>
    %c0_22 = arith.constant 0 : index
    %c0_23 = arith.constant 0 : index
    %c0_24 = arith.constant 0 : index
    %40 = vector.load %arg7[%c0_22, %c0_23, %c0_24] : memref<2x32x32xf32, #tpu.memory_space<vmem>>, vector<1x32x32xf32>
    %41 = vector.shape_cast %40 : vector<1x32x32xf32> to vector<32x32xf32>
    %c0_25 = arith.constant 0 : index
    %c0_26 = arith.constant 0 : index
    %c0_27 = arith.constant 0 : index
    %42 = vector.load %arg8[%c0_25, %c0_26, %c0_27] : memref<2x1x32xf32, #tpu.memory_space<vmem>>, vector<1x1x32xf32>
    %43 = vector.shape_cast %42 : vector<1x1x32xf32> to vector<1x32xf32>
    %44 = vector.extract_strided_slice %39 {offsets = [0, 0], sizes = [16, 16], strides = [1, 1]} : vector<16x96xf32> to vector<16x16xf32>
    %45 = vector.shape_cast %44 : vector<16x16xf32> to vector<2x8x16xf32>
    %46 = vector.extract_strided_slice %39 {offsets = [0, 32], sizes = [16, 16], strides = [1, 1]} : vector<16x96xf32> to vector<16x16xf32>
    %47 = vector.shape_cast %46 : vector<16x16xf32> to vector<2x8x16xf32>
    %48 = vector.extract_strided_slice %39 {offsets = [0, 64], sizes = [16, 16], strides = [1, 1]} : vector<16x96xf32> to vector<16x16xf32>
    %49 = vector.shape_cast %48 : vector<16x16xf32> to vector<2x8x16xf32>
    "tpu.trace_start"() <{level = 10 : i32, message = "bqd,bkd->bqk"}> : () -> ()
    %cst_28 = arith.constant dense<0.000000e+00> : vector<2x8x8xf32>
    %50 = tpu.matmul %45, %47, %cst_28 {dimension_numbers = #tpu.dot_dimension_numbers<[2], [2], [1], [1], [0, 0, 0, 1, 1, 1], [0], [0]>} : vector<2x8x16xf32>, vector<2x8x16xf32>, vector<2x8x8xf32> -> vector<2x8x8xf32>
    "tpu.trace_stop"() : () -> ()
    %cst_29 = arith.constant 2.500000e-01 : f32
    %51 = vector.broadcast %cst_29 : f32 to vector<2x8x8xf32>
    %52 = arith.mulf %50, %51 : vector<2x8x8xf32>
    %53 = vector.broadcast %32 : vector<2x1x8xf32> to vector<2x8x8xf32>
    %54 = arith.addf %52, %53 : vector<2x8x8xf32>
    %cst_30 = arith.constant dense<0xFF800000> : vector<2x8xf32>
    %55 = vector.multi_reduction <maximumf>, %54, %cst_30 [2] : vector<2x8x8xf32> to vector<2x8xf32>
    %56 = vector.shape_cast %55 : vector<2x8xf32> to vector<2x8x1xf32>
    %57 = vector.broadcast %56 : vector<2x8x1xf32> to vector<2x8x8xf32>
    %58 = arith.subf %54, %57 : vector<2x8x8xf32>
    %59 = math.exp %58 : vector<2x8x8xf32>
    %cst_31 = arith.constant dense<0.000000e+00> : vector<2x8xf32>
    %60 = vector.multi_reduction <add>, %59, %cst_31 [2] : vector<2x8x8xf32> to vector<2x8xf32>
    %61 = vector.shape_cast %60 : vector<2x8xf32> to vector<2x8x1xf32>
    %62 = tpu.reciprocal %61 {approx = true} : vector<2x8x1xf32> -> vector<2x8x1xf32>
    %63 = vector.broadcast %62 : vector<2x8x1xf32> to vector<2x8x8xf32>
    %64 = arith.mulf %59, %63 : vector<2x8x8xf32>
    "tpu.trace_start"() <{level = 10 : i32, message = "bqk,bkd->bqd"}> : () -> ()
    %cst_32 = arith.constant dense<0.000000e+00> : vector<2x8x16xf32>
    %65 = tpu.matmul %64, %49, %cst_32 {dimension_numbers = #tpu.dot_dimension_numbers<[2], [1], [1], [2], [0, 0, 0, 1, 1, 2], [0], [0]>} : vector<2x8x8xf32>, vector<2x8x16xf32>, vector<2x8x16xf32> -> vector<2x8x16xf32>
    "tpu.trace_stop"() : () -> ()
    %66 = vector.shape_cast %65 : vector<2x8x16xf32> to vector<16x16xf32>
    %67 = vector.extract_strided_slice %41 {offsets = [0, 0], sizes = [16, 32], strides = [1, 1]} : vector<32x32xf32> to vector<16x32xf32>
    %cst_33 = arith.constant dense<0.000000e+00> : vector<16x32xf32>
    %68 = tpu.matmul %66, %67, %cst_33 {dimension_numbers = #tpu.dot_dimension_numbers<[1], [0], [0], [1], [0, 0, 1, 1], [], []>} : vector<16x16xf32>, vector<16x32xf32>, vector<16x32xf32> -> vector<16x32xf32>
    %69 = vector.broadcast %43 : vector<1x32xf32> to vector<16x32xf32>
    %70 = arith.addf %69, %68 : vector<16x32xf32>
    %71 = vector.extract_strided_slice %39 {offsets = [0, 16], sizes = [16, 16], strides = [1, 1]} : vector<16x96xf32> to vector<16x16xf32>
    %72 = vector.shape_cast %71 : vector<16x16xf32> to vector<2x8x16xf32>
    %73 = vector.extract_strided_slice %39 {offsets = [0, 48], sizes = [16, 16], strides = [1, 1]} : vector<16x96xf32> to vector<16x16xf32>
    %74 = vector.shape_cast %73 : vector<16x16xf32> to vector<2x8x16xf32>
    %75 = vector.extract_strided_slice %39 {offsets = [0, 80], sizes = [16, 16], strides = [1, 1]} : vector<16x96xf32> to vector<16x16xf32>
    %76 = vector.shape_cast %75 : vector<16x16xf32> to vector<2x8x16xf32>
    "tpu.trace_start"() <{level = 10 : i32, message = "bqd,bkd->bqk"}> : () -> ()
    %cst_34 = arith.constant dense<0.000000e+00> : vector<2x8x8xf32>
    %77 = tpu.matmul %72, %74, %cst_34 {dimension_numbers = #tpu.dot_dimension_numbers<[2], [2], [1], [1], [0, 0, 0, 1, 1, 1], [0], [0]>} : vector<2x8x16xf32>, vector<2x8x16xf32>, vector<2x8x8xf32> -> vector<2x8x8xf32>
    "tpu.trace_stop"() : () -> ()
    %cst_35 = arith.constant 2.500000e-01 : f32
    %78 = vector.broadcast %cst_35 : f32 to vector<2x8x8xf32>
    %79 = arith.mulf %77, %78 : vector<2x8x8xf32>
    %80 = vector.broadcast %32 : vector<2x1x8xf32> to vector<2x8x8xf32>
    %81 = arith.addf %79, %80 : vector<2x8x8xf32>
    %cst_36 = arith.constant dense<0xFF800000> : vector<2x8xf32>
    %82 = vector.multi_reduction <maximumf>, %81, %cst_36 [2] : vector<2x8x8xf32> to vector<2x8xf32>
    %83 = vector.shape_cast %82 : vector<2x8xf32> to vector<2x8x1xf32>
    %84 = vector.broadcast %83 : vector<2x8x1xf32> to vector<2x8x8xf32>
    %85 = arith.subf %81, %84 : vector<2x8x8xf32>
    %86 = math.exp %85 : vector<2x8x8xf32>
    %cst_37 = arith.constant dense<0.000000e+00> : vector<2x8xf32>
    %87 = vector.multi_reduction <add>, %86, %cst_37 [2] : vector<2x8x8xf32> to vector<2x8xf32>
    %88 = vector.shape_cast %87 : vector<2x8xf32> to vector<2x8x1xf32>
    %89 = tpu.reciprocal %88 {approx = true} : vector<2x8x1xf32> -> vector<2x8x1xf32>
    %90 = vector.broadcast %89 : vector<2x8x1xf32> to vector<2x8x8xf32>
    %91 = arith.mulf %86, %90 : vector<2x8x8xf32>
    "tpu.trace_start"() <{level = 10 : i32, message = "bqk,bkd->bqd"}> : () -> ()
    %cst_38 = arith.constant dense<0.000000e+00> : vector<2x8x16xf32>
    %92 = tpu.matmul %91, %76, %cst_38 {dimension_numbers = #tpu.dot_dimension_numbers<[2], [1], [1], [2], [0, 0, 0, 1, 1, 2], [0], [0]>} : vector<2x8x8xf32>, vector<2x8x16xf32>, vector<2x8x16xf32> -> vector<2x8x16xf32>
    "tpu.trace_stop"() : () -> ()
    %93 = vector.shape_cast %92 : vector<2x8x16xf32> to vector<16x16xf32>
    %94 = vector.extract_strided_slice %41 {offsets = [16, 0], sizes = [16, 32], strides = [1, 1]} : vector<32x32xf32> to vector<16x32xf32>
    %cst_39 = arith.constant dense<0.000000e+00> : vector<16x32xf32>
    %95 = tpu.matmul %93, %94, %cst_39 {dimension_numbers = #tpu.dot_dimension_numbers<[1], [0], [0], [1], [0, 0, 1, 1], [], []>} : vector<16x16xf32>, vector<16x32xf32>, vector<16x32xf32> -> vector<16x32xf32>
    %96 = arith.addf %70, %95 : vector<16x32xf32>
    %97 = arith.addf %23, %96 : vector<16x32xf32>
    %c0_40 = arith.constant 0 : index
    %c0_41 = arith.constant 0 : index
    %c0_42 = arith.constant 0 : index
    %98 = vector.load %arg9[%c0_40, %c0_41, %c0_42] : memref<2x1x32xf32, #tpu.memory_space<vmem>>, vector<1x1x32xf32>
    %99 = vector.shape_cast %98 : vector<1x1x32xf32> to vector<1x32xf32>
    %c0_43 = arith.constant 0 : index
    %c0_44 = arith.constant 0 : index
    %c0_45 = arith.constant 0 : index
    %100 = vector.load %arg10[%c0_43, %c0_44, %c0_45] : memref<2x1x32xf32, #tpu.memory_space<vmem>>, vector<1x1x32xf32>
    %101 = vector.shape_cast %100 : vector<1x1x32xf32> to vector<1x32xf32>
    %cst_46 = arith.constant dense<0.000000e+00> : vector<16xf32>
    %102 = vector.multi_reduction <add>, %97, %cst_46 [1] : vector<16x32xf32> to vector<16xf32>
    %103 = vector.shape_cast %102 : vector<16xf32> to vector<16x1xf32>
    %cst_47 = arith.constant 3.200000e+01 : f32
    %104 = vector.broadcast %cst_47 : f32 to vector<16x1xf32>
    %105 = arith.divf %103, %104 : vector<16x1xf32>
    %106 = vector.broadcast %105 : vector<16x1xf32> to vector<16x32xf32>
    %107 = arith.subf %97, %106 : vector<16x32xf32>
    %108 = arith.mulf %107, %107 : vector<16x32xf32>
    %cst_48 = arith.constant dense<0.000000e+00> : vector<16xf32>
    %109 = vector.multi_reduction <add>, %108, %cst_48 [1] : vector<16x32xf32> to vector<16xf32>
    %110 = vector.shape_cast %109 : vector<16xf32> to vector<16x1xf32>
    %cst_49 = arith.constant 3.200000e+01 : f32
    %111 = vector.broadcast %cst_49 : f32 to vector<16x1xf32>
    %112 = arith.divf %110, %111 : vector<16x1xf32>
    %cst_50 = arith.constant 9.99999996E-13 : f32
    %113 = vector.broadcast %cst_50 : f32 to vector<16x1xf32>
    %114 = arith.addf %112, %113 : vector<16x1xf32>
    %115 = math.rsqrt %114 : vector<16x1xf32>
    %116 = vector.broadcast %115 : vector<16x1xf32> to vector<16x32xf32>
    %117 = arith.mulf %107, %116 : vector<16x32xf32>
    %118 = vector.broadcast %99 : vector<1x32xf32> to vector<16x32xf32>
    %119 = arith.mulf %117, %118 : vector<16x32xf32>
    %120 = vector.broadcast %101 : vector<1x32xf32> to vector<16x32xf32>
    %121 = arith.addf %119, %120 : vector<16x32xf32>
    %c0_51 = arith.constant 0 : index
    %c0_52 = arith.constant 0 : index
    %c0_53 = arith.constant 0 : index
    %122 = vector.load %arg11[%c0_51, %c0_52, %c0_53] : memref<2x32x64xf32, #tpu.memory_space<vmem>>, vector<1x32x64xf32>
    %123 = vector.shape_cast %122 : vector<1x32x64xf32> to vector<32x64xf32>
    %cst_54 = arith.constant dense<0.000000e+00> : vector<16x64xf32>
    %124 = tpu.matmul %121, %123, %cst_54 {dimension_numbers = #tpu.dot_dimension_numbers<[1], [0], [0], [1], [0, 0, 1, 1], [], []>} : vector<16x32xf32>, vector<32x64xf32>, vector<16x64xf32> -> vector<16x64xf32>
    %c0_55 = arith.constant 0 : index
    %c0_56 = arith.constant 0 : index
    %c0_57 = arith.constant 0 : index
    %125 = vector.load %arg12[%c0_55, %c0_56, %c0_57] : memref<2x1x64xf32, #tpu.memory_space<vmem>>, vector<1x1x64xf32>
    %126 = vector.shape_cast %125 : vector<1x1x64xf32> to vector<1x64xf32>
    %127 = vector.broadcast %126 : vector<1x64xf32> to vector<16x64xf32>
    %128 = arith.addf %124, %127 : vector<16x64xf32>
    %cst_58 = arith.constant 5.000000e-01 : f32
    %129 = vector.broadcast %cst_58 : f32 to vector<16x64xf32>
    %130 = arith.mulf %129, %128 : vector<16x64xf32>
    %cst_59 = arith.constant 4.471500e-02 : f32
    %131 = vector.broadcast %cst_59 : f32 to vector<16x64xf32>
    %132 = arith.mulf %131, %128 : vector<16x64xf32>
    %133 = arith.mulf %132, %128 : vector<16x64xf32>
    %134 = arith.mulf %133, %128 : vector<16x64xf32>
    %135 = arith.addf %128, %134 : vector<16x64xf32>
    %cst_60 = arith.constant 0.797884583 : f32
    %136 = vector.broadcast %cst_60 : f32 to vector<16x64xf32>
    %137 = arith.mulf %136, %135 : vector<16x64xf32>
    %138 = math.tanh %137 : vector<16x64xf32>
    %cst_61 = arith.constant 1.000000e+00 : f32
    %139 = vector.broadcast %cst_61 : f32 to vector<16x64xf32>
    %140 = arith.addf %139, %138 : vector<16x64xf32>
    %141 = arith.mulf %130, %140 : vector<16x64xf32>
    %c0_62 = arith.constant 0 : index
    %c0_63 = arith.constant 0 : index
    %c0_64 = arith.constant 0 : index
    %142 = vector.load %arg13[%c0_62, %c0_63, %c0_64] : memref<2x64x32xf32, #tpu.memory_space<vmem>>, vector<1x64x32xf32>
    %143 = vector.shape_cast %142 : vector<1x64x32xf32> to vector<64x32xf32>
    %cst_65 = arith.constant dense<0.000000e+00> : vector<16x32xf32>
    %144 = tpu.matmul %141, %143, %cst_65 {dimension_numbers = #tpu.dot_dimension_numbers<[1], [0], [0], [1], [0, 0, 1, 1], [], []>} : vector<16x64xf32>, vector<64x32xf32>, vector<16x32xf32> -> vector<16x32xf32>
    %c0_66 = arith.constant 0 : index
    %c0_67 = arith.constant 0 : index
    %c0_68 = arith.constant 0 : index
    %145 = vector.load %arg14[%c0_66, %c0_67, %c0_68] : memref<2x1x32xf32, #tpu.memory_space<vmem>>, vector<1x1x32xf32>
    %146 = vector.shape_cast %145 : vector<1x1x32xf32> to vector<1x32xf32>
    %147 = vector.broadcast %146 : vector<1x32xf32> to vector<16x32xf32>
    %148 = arith.addf %144, %147 : vector<16x32xf32>
    %149 = arith.addf %121, %148 : vector<16x32xf32>
    %c0_69 = arith.constant 0 : index
    %c0_70 = arith.constant 0 : index
    %c0_71 = arith.constant 0 : index
    %150 = vector.load %arg15[%c0_69, %c0_70, %c0_71] : memref<2x1x32xf32, #tpu.memory_space<vmem>>, vector<1x1x32xf32>
    %151 = vector.shape_cast %150 : vector<1x1x32xf32> to vector<1x32xf32>
    %c0_72 = arith.constant 0 : index
    %c0_73 = arith.constant 0 : index
    %c0_74 = arith.constant 0 : index
    %152 = vector.load %arg16[%c0_72, %c0_73, %c0_74] : memref<2x1x32xf32, #tpu.memory_space<vmem>>, vector<1x1x32xf32>
    %153 = vector.shape_cast %152 : vector<1x1x32xf32> to vector<1x32xf32>
    %cst_75 = arith.constant dense<0.000000e+00> : vector<16xf32>
    %154 = vector.multi_reduction <add>, %149, %cst_75 [1] : vector<16x32xf32> to vector<16xf32>
    %155 = vector.shape_cast %154 : vector<16xf32> to vector<16x1xf32>
    %cst_76 = arith.constant 3.200000e+01 : f32
    %156 = vector.broadcast %cst_76 : f32 to vector<16x1xf32>
    %157 = arith.divf %155, %156 : vector<16x1xf32>
    %158 = vector.broadcast %157 : vector<16x1xf32> to vector<16x32xf32>
    %159 = arith.subf %149, %158 : vector<16x32xf32>
    %160 = arith.mulf %159, %159 : vector<16x32xf32>
    %cst_77 = arith.constant dense<0.000000e+00> : vector<16xf32>
    %161 = vector.multi_reduction <add>, %160, %cst_77 [1] : vector<16x32xf32> to vector<16xf32>
    %162 = vector.shape_cast %161 : vector<16xf32> to vector<16x1xf32>
    %cst_78 = arith.constant 3.200000e+01 : f32
    %163 = vector.broadcast %cst_78 : f32 to vector<16x1xf32>
    %164 = arith.divf %162, %163 : vector<16x1xf32>
    %cst_79 = arith.constant 9.99999996E-13 : f32
    %165 = vector.broadcast %cst_79 : f32 to vector<16x1xf32>
    %166 = arith.addf %164, %165 : vector<16x1xf32>
    %167 = math.rsqrt %166 : vector<16x1xf32>
    %168 = vector.broadcast %167 : vector<16x1xf32> to vector<16x32xf32>
    %169 = arith.mulf %159, %168 : vector<16x32xf32>
    %170 = vector.broadcast %151 : vector<1x32xf32> to vector<16x32xf32>
    %171 = arith.mulf %169, %170 : vector<16x32xf32>
    %172 = vector.broadcast %153 : vector<1x32xf32> to vector<16x32xf32>
    %173 = arith.addf %171, %172 : vector<16x32xf32>
    %c1 = arith.constant 1 : index
    %c0_80 = arith.constant 0 : index
    %c0_81 = arith.constant 0 : index
    %174 = vector.load %arg5[%c1, %c0_80, %c0_81] : memref<2x32x96xf32, #tpu.memory_space<vmem>>, vector<1x32x96xf32>
    %175 = vector.shape_cast %174 : vector<1x32x96xf32> to vector<32x96xf32>
    %cst_82 = arith.constant dense<0.000000e+00> : vector<16x96xf32>
    %176 = tpu.matmul %173, %175, %cst_82 {dimension_numbers = #tpu.dot_dimension_numbers<[1], [0], [0], [1], [0, 0, 1, 1], [], []>} : vector<16x32xf32>, vector<32x96xf32>, vector<16x96xf32> -> vector<16x96xf32>
    %c1_83 = arith.constant 1 : index
    %c0_84 = arith.constant 0 : index
    %c0_85 = arith.constant 0 : index
    %177 = vector.load %arg6[%c1_83, %c0_84, %c0_85] : memref<2x1x96xf32, #tpu.memory_space<vmem>>, vector<1x1x96xf32>
    %178 = vector.shape_cast %177 : vector<1x1x96xf32> to vector<1x96xf32>
    %179 = vector.broadcast %178 : vector<1x96xf32> to vector<16x96xf32>
    %180 = arith.addf %176, %179 : vector<16x96xf32>
    %c1_86 = arith.constant 1 : index
    %c0_87 = arith.constant 0 : index
    %c0_88 = arith.constant 0 : index
    %181 = vector.load %arg7[%c1_86, %c0_87, %c0_88] : memref<2x32x32xf32, #tpu.memory_space<vmem>>, vector<1x32x32xf32>
    %182 = vector.shape_cast %181 : vector<1x32x32xf32> to vector<32x32xf32>
    %c1_89 = arith.constant 1 : index
    %c0_90 = arith.constant 0 : index
    %c0_91 = arith.constant 0 : index
    %183 = vector.load %arg8[%c1_89, %c0_90, %c0_91] : memref<2x1x32xf32, #tpu.memory_space<vmem>>, vector<1x1x32xf32>
    %184 = vector.shape_cast %183 : vector<1x1x32xf32> to vector<1x32xf32>
    %185 = vector.extract_strided_slice %180 {offsets = [0, 0], sizes = [16, 16], strides = [1, 1]} : vector<16x96xf32> to vector<16x16xf32>
    %186 = vector.shape_cast %185 : vector<16x16xf32> to vector<2x8x16xf32>
    %187 = vector.extract_strided_slice %180 {offsets = [0, 32], sizes = [16, 16], strides = [1, 1]} : vector<16x96xf32> to vector<16x16xf32>
    %188 = vector.shape_cast %187 : vector<16x16xf32> to vector<2x8x16xf32>
    %189 = vector.extract_strided_slice %180 {offsets = [0, 64], sizes = [16, 16], strides = [1, 1]} : vector<16x96xf32> to vector<16x16xf32>
    %190 = vector.shape_cast %189 : vector<16x16xf32> to vector<2x8x16xf32>
    "tpu.trace_start"() <{level = 10 : i32, message = "bqd,bkd->bqk"}> : () -> ()
    %cst_92 = arith.constant dense<0.000000e+00> : vector<2x8x8xf32>
    %191 = tpu.matmul %186, %188, %cst_92 {dimension_numbers = #tpu.dot_dimension_numbers<[2], [2], [1], [1], [0, 0, 0, 1, 1, 1], [0], [0]>} : vector<2x8x16xf32>, vector<2x8x16xf32>, vector<2x8x8xf32> -> vector<2x8x8xf32>
    "tpu.trace_stop"() : () -> ()
    %cst_93 = arith.constant 2.500000e-01 : f32
    %192 = vector.broadcast %cst_93 : f32 to vector<2x8x8xf32>
    %193 = arith.mulf %191, %192 : vector<2x8x8xf32>
    %194 = vector.broadcast %32 : vector<2x1x8xf32> to vector<2x8x8xf32>
    %195 = arith.addf %193, %194 : vector<2x8x8xf32>
    %cst_94 = arith.constant dense<0xFF800000> : vector<2x8xf32>
    %196 = vector.multi_reduction <maximumf>, %195, %cst_94 [2] : vector<2x8x8xf32> to vector<2x8xf32>
    %197 = vector.shape_cast %196 : vector<2x8xf32> to vector<2x8x1xf32>
    %198 = vector.broadcast %197 : vector<2x8x1xf32> to vector<2x8x8xf32>
    %199 = arith.subf %195, %198 : vector<2x8x8xf32>
    %200 = math.exp %199 : vector<2x8x8xf32>
    %cst_95 = arith.constant dense<0.000000e+00> : vector<2x8xf32>
    %201 = vector.multi_reduction <add>, %200, %cst_95 [2] : vector<2x8x8xf32> to vector<2x8xf32>
    %202 = vector.shape_cast %201 : vector<2x8xf32> to vector<2x8x1xf32>
    %203 = tpu.reciprocal %202 {approx = true} : vector<2x8x1xf32> -> vector<2x8x1xf32>
    %204 = vector.broadcast %203 : vector<2x8x1xf32> to vector<2x8x8xf32>
    %205 = arith.mulf %200, %204 : vector<2x8x8xf32>
    "tpu.trace_start"() <{level = 10 : i32, message = "bqk,bkd->bqd"}> : () -> ()
    %cst_96 = arith.constant dense<0.000000e+00> : vector<2x8x16xf32>
    %206 = tpu.matmul %205, %190, %cst_96 {dimension_numbers = #tpu.dot_dimension_numbers<[2], [1], [1], [2], [0, 0, 0, 1, 1, 2], [0], [0]>} : vector<2x8x8xf32>, vector<2x8x16xf32>, vector<2x8x16xf32> -> vector<2x8x16xf32>
    "tpu.trace_stop"() : () -> ()
    %207 = vector.shape_cast %206 : vector<2x8x16xf32> to vector<16x16xf32>
    %208 = vector.extract_strided_slice %182 {offsets = [0, 0], sizes = [16, 32], strides = [1, 1]} : vector<32x32xf32> to vector<16x32xf32>
    %cst_97 = arith.constant dense<0.000000e+00> : vector<16x32xf32>
    %209 = tpu.matmul %207, %208, %cst_97 {dimension_numbers = #tpu.dot_dimension_numbers<[1], [0], [0], [1], [0, 0, 1, 1], [], []>} : vector<16x16xf32>, vector<16x32xf32>, vector<16x32xf32> -> vector<16x32xf32>
    %210 = vector.broadcast %184 : vector<1x32xf32> to vector<16x32xf32>
    %211 = arith.addf %210, %209 : vector<16x32xf32>
    %212 = vector.extract_strided_slice %180 {offsets = [0, 16], sizes = [16, 16], strides = [1, 1]} : vector<16x96xf32> to vector<16x16xf32>
    %213 = vector.shape_cast %212 : vector<16x16xf32> to vector<2x8x16xf32>
    %214 = vector.extract_strided_slice %180 {offsets = [0, 48], sizes = [16, 16], strides = [1, 1]} : vector<16x96xf32> to vector<16x16xf32>
    %215 = vector.shape_cast %214 : vector<16x16xf32> to vector<2x8x16xf32>
    %216 = vector.extract_strided_slice %180 {offsets = [0, 80], sizes = [16, 16], strides = [1, 1]} : vector<16x96xf32> to vector<16x16xf32>
    %217 = vector.shape_cast %216 : vector<16x16xf32> to vector<2x8x16xf32>
    "tpu.trace_start"() <{level = 10 : i32, message = "bqd,bkd->bqk"}> : () -> ()
    %cst_98 = arith.constant dense<0.000000e+00> : vector<2x8x8xf32>
    %218 = tpu.matmul %213, %215, %cst_98 {dimension_numbers = #tpu.dot_dimension_numbers<[2], [2], [1], [1], [0, 0, 0, 1, 1, 1], [0], [0]>} : vector<2x8x16xf32>, vector<2x8x16xf32>, vector<2x8x8xf32> -> vector<2x8x8xf32>
    "tpu.trace_stop"() : () -> ()
    %cst_99 = arith.constant 2.500000e-01 : f32
    %219 = vector.broadcast %cst_99 : f32 to vector<2x8x8xf32>
    %220 = arith.mulf %218, %219 : vector<2x8x8xf32>
    %221 = vector.broadcast %32 : vector<2x1x8xf32> to vector<2x8x8xf32>
    %222 = arith.addf %220, %221 : vector<2x8x8xf32>
    %cst_100 = arith.constant dense<0xFF800000> : vector<2x8xf32>
    %223 = vector.multi_reduction <maximumf>, %222, %cst_100 [2] : vector<2x8x8xf32> to vector<2x8xf32>
    %224 = vector.shape_cast %223 : vector<2x8xf32> to vector<2x8x1xf32>
    %225 = vector.broadcast %224 : vector<2x8x1xf32> to vector<2x8x8xf32>
    %226 = arith.subf %222, %225 : vector<2x8x8xf32>
    %227 = math.exp %226 : vector<2x8x8xf32>
    %cst_101 = arith.constant dense<0.000000e+00> : vector<2x8xf32>
    %228 = vector.multi_reduction <add>, %227, %cst_101 [2] : vector<2x8x8xf32> to vector<2x8xf32>
    %229 = vector.shape_cast %228 : vector<2x8xf32> to vector<2x8x1xf32>
    %230 = tpu.reciprocal %229 {approx = true} : vector<2x8x1xf32> -> vector<2x8x1xf32>
    %231 = vector.broadcast %230 : vector<2x8x1xf32> to vector<2x8x8xf32>
    %232 = arith.mulf %227, %231 : vector<2x8x8xf32>
    "tpu.trace_start"() <{level = 10 : i32, message = "bqk,bkd->bqd"}> : () -> ()
    %cst_102 = arith.constant dense<0.000000e+00> : vector<2x8x16xf32>
    %233 = tpu.matmul %232, %217, %cst_102 {dimension_numbers = #tpu.dot_dimension_numbers<[2], [1], [1], [2], [0, 0, 0, 1, 1, 2], [0], [0]>} : vector<2x8x8xf32>, vector<2x8x16xf32>, vector<2x8x16xf32> -> vector<2x8x16xf32>
    "tpu.trace_stop"() : () -> ()
    %234 = vector.shape_cast %233 : vector<2x8x16xf32> to vector<16x16xf32>
    %235 = vector.extract_strided_slice %182 {offsets = [16, 0], sizes = [16, 32], strides = [1, 1]} : vector<32x32xf32> to vector<16x32xf32>
    %cst_103 = arith.constant dense<0.000000e+00> : vector<16x32xf32>
    %236 = tpu.matmul %234, %235, %cst_103 {dimension_numbers = #tpu.dot_dimension_numbers<[1], [0], [0], [1], [0, 0, 1, 1], [], []>} : vector<16x16xf32>, vector<16x32xf32>, vector<16x32xf32> -> vector<16x32xf32>
    %237 = arith.addf %211, %236 : vector<16x32xf32>
    %238 = arith.addf %173, %237 : vector<16x32xf32>
    %c1_104 = arith.constant 1 : index
    %c0_105 = arith.constant 0 : index
    %c0_106 = arith.constant 0 : index
    %239 = vector.load %arg9[%c1_104, %c0_105, %c0_106] : memref<2x1x32xf32, #tpu.memory_space<vmem>>, vector<1x1x32xf32>
    %240 = vector.shape_cast %239 : vector<1x1x32xf32> to vector<1x32xf32>
    %c1_107 = arith.constant 1 : index
    %c0_108 = arith.constant 0 : index
    %c0_109 = arith.constant 0 : index
    %241 = vector.load %arg10[%c1_107, %c0_108, %c0_109] : memref<2x1x32xf32, #tpu.memory_space<vmem>>, vector<1x1x32xf32>
    %242 = vector.shape_cast %241 : vector<1x1x32xf32> to vector<1x32xf32>
    %cst_110 = arith.constant dense<0.000000e+00> : vector<16xf32>
    %243 = vector.multi_reduction <add>, %238, %cst_110 [1] : vector<16x32xf32> to vector<16xf32>
    %244 = vector.shape_cast %243 : vector<16xf32> to vector<16x1xf32>
    %cst_111 = arith.constant 3.200000e+01 : f32
    %245 = vector.broadcast %cst_111 : f32 to vector<16x1xf32>
    %246 = arith.divf %244, %245 : vector<16x1xf32>
    %247 = vector.broadcast %246 : vector<16x1xf32> to vector<16x32xf32>
    %248 = arith.subf %238, %247 : vector<16x32xf32>
    %249 = arith.mulf %248, %248 : vector<16x32xf32>
    %cst_112 = arith.constant dense<0.000000e+00> : vector<16xf32>
    %250 = vector.multi_reduction <add>, %249, %cst_112 [1] : vector<16x32xf32> to vector<16xf32>
    %251 = vector.shape_cast %250 : vector<16xf32> to vector<16x1xf32>
    %cst_113 = arith.constant 3.200000e+01 : f32
    %252 = vector.broadcast %cst_113 : f32 to vector<16x1xf32>
    %253 = arith.divf %251, %252 : vector<16x1xf32>
    %cst_114 = arith.constant 9.99999996E-13 : f32
    %254 = vector.broadcast %cst_114 : f32 to vector<16x1xf32>
    %255 = arith.addf %253, %254 : vector<16x1xf32>
    %256 = math.rsqrt %255 : vector<16x1xf32>
    %257 = vector.broadcast %256 : vector<16x1xf32> to vector<16x32xf32>
    %258 = arith.mulf %248, %257 : vector<16x32xf32>
    %259 = vector.broadcast %240 : vector<1x32xf32> to vector<16x32xf32>
    %260 = arith.mulf %258, %259 : vector<16x32xf32>
    %261 = vector.broadcast %242 : vector<1x32xf32> to vector<16x32xf32>
    %262 = arith.addf %260, %261 : vector<16x32xf32>
    %c1_115 = arith.constant 1 : index
    %c0_116 = arith.constant 0 : index
    %c0_117 = arith.constant 0 : index
    %263 = vector.load %arg11[%c1_115, %c0_116, %c0_117] : memref<2x32x64xf32, #tpu.memory_space<vmem>>, vector<1x32x64xf32>
    %264 = vector.shape_cast %263 : vector<1x32x64xf32> to vector<32x64xf32>
    %cst_118 = arith.constant dense<0.000000e+00> : vector<16x64xf32>
    %265 = tpu.matmul %262, %264, %cst_118 {dimension_numbers = #tpu.dot_dimension_numbers<[1], [0], [0], [1], [0, 0, 1, 1], [], []>} : vector<16x32xf32>, vector<32x64xf32>, vector<16x64xf32> -> vector<16x64xf32>
    %c1_119 = arith.constant 1 : index
    %c0_120 = arith.constant 0 : index
    %c0_121 = arith.constant 0 : index
    %266 = vector.load %arg12[%c1_119, %c0_120, %c0_121] : memref<2x1x64xf32, #tpu.memory_space<vmem>>, vector<1x1x64xf32>
    %267 = vector.shape_cast %266 : vector<1x1x64xf32> to vector<1x64xf32>
    %268 = vector.broadcast %267 : vector<1x64xf32> to vector<16x64xf32>
    %269 = arith.addf %265, %268 : vector<16x64xf32>
    %cst_122 = arith.constant 5.000000e-01 : f32
    %270 = vector.broadcast %cst_122 : f32 to vector<16x64xf32>
    %271 = arith.mulf %270, %269 : vector<16x64xf32>
    %cst_123 = arith.constant 4.471500e-02 : f32
    %272 = vector.broadcast %cst_123 : f32 to vector<16x64xf32>
    %273 = arith.mulf %272, %269 : vector<16x64xf32>
    %274 = arith.mulf %273, %269 : vector<16x64xf32>
    %275 = arith.mulf %274, %269 : vector<16x64xf32>
    %276 = arith.addf %269, %275 : vector<16x64xf32>
    %cst_124 = arith.constant 0.797884583 : f32
    %277 = vector.broadcast %cst_124 : f32 to vector<16x64xf32>
    %278 = arith.mulf %277, %276 : vector<16x64xf32>
    %279 = math.tanh %278 : vector<16x64xf32>
    %cst_125 = arith.constant 1.000000e+00 : f32
    %280 = vector.broadcast %cst_125 : f32 to vector<16x64xf32>
    %281 = arith.addf %280, %279 : vector<16x64xf32>
    %282 = arith.mulf %271, %281 : vector<16x64xf32>
    %c1_126 = arith.constant 1 : index
    %c0_127 = arith.constant 0 : index
    %c0_128 = arith.constant 0 : index
    %283 = vector.load %arg13[%c1_126, %c0_127, %c0_128] : memref<2x64x32xf32, #tpu.memory_space<vmem>>, vector<1x64x32xf32>
    %284 = vector.shape_cast %283 : vector<1x64x32xf32> to vector<64x32xf32>
    %cst_129 = arith.constant dense<0.000000e+00> : vector<16x32xf32>
    %285 = tpu.matmul %282, %284, %cst_129 {dimension_numbers = #tpu.dot_dimension_numbers<[1], [0], [0], [1], [0, 0, 1, 1], [], []>} : vector<16x64xf32>, vector<64x32xf32>, vector<16x32xf32> -> vector<16x32xf32>
    %c1_130 = arith.constant 1 : index
    %c0_131 = arith.constant 0 : index
    %c0_132 = arith.constant 0 : index
    %286 = vector.load %arg14[%c1_130, %c0_131, %c0_132] : memref<2x1x32xf32, #tpu.memory_space<vmem>>, vector<1x1x32xf32>
    %287 = vector.shape_cast %286 : vector<1x1x32xf32> to vector<1x32xf32>
    %288 = vector.broadcast %287 : vector<1x32xf32> to vector<16x32xf32>
    %289 = arith.addf %285, %288 : vector<16x32xf32>
    %290 = arith.addf %262, %289 : vector<16x32xf32>
    %c1_133 = arith.constant 1 : index
    %c0_134 = arith.constant 0 : index
    %c0_135 = arith.constant 0 : index
    %291 = vector.load %arg15[%c1_133, %c0_134, %c0_135] : memref<2x1x32xf32, #tpu.memory_space<vmem>>, vector<1x1x32xf32>
    %292 = vector.shape_cast %291 : vector<1x1x32xf32> to vector<1x32xf32>
    %c1_136 = arith.constant 1 : index
    %c0_137 = arith.constant 0 : index
    %c0_138 = arith.constant 0 : index
    %293 = vector.load %arg16[%c1_136, %c0_137, %c0_138] : memref<2x1x32xf32, #tpu.memory_space<vmem>>, vector<1x1x32xf32>
    %294 = vector.shape_cast %293 : vector<1x1x32xf32> to vector<1x32xf32>
    %cst_139 = arith.constant dense<0.000000e+00> : vector<16xf32>
    %295 = vector.multi_reduction <add>, %290, %cst_139 [1] : vector<16x32xf32> to vector<16xf32>
    %296 = vector.shape_cast %295 : vector<16xf32> to vector<16x1xf32>
    %cst_140 = arith.constant 3.200000e+01 : f32
    %297 = vector.broadcast %cst_140 : f32 to vector<16x1xf32>
    %298 = arith.divf %296, %297 : vector<16x1xf32>
    %299 = vector.broadcast %298 : vector<16x1xf32> to vector<16x32xf32>
    %300 = arith.subf %290, %299 : vector<16x32xf32>
    %301 = arith.mulf %300, %300 : vector<16x32xf32>
    %cst_141 = arith.constant dense<0.000000e+00> : vector<16xf32>
    %302 = vector.multi_reduction <add>, %301, %cst_141 [1] : vector<16x32xf32> to vector<16xf32>
    %303 = vector.shape_cast %302 : vector<16xf32> to vector<16x1xf32>
    %cst_142 = arith.constant 3.200000e+01 : f32
    %304 = vector.broadcast %cst_142 : f32 to vector<16x1xf32>
    %305 = arith.divf %303, %304 : vector<16x1xf32>
    %cst_143 = arith.constant 9.99999996E-13 : f32
    %306 = vector.broadcast %cst_143 : f32 to vector<16x1xf32>
    %307 = arith.addf %305, %306 : vector<16x1xf32>
    %308 = math.rsqrt %307 : vector<16x1xf32>
    %309 = vector.broadcast %308 : vector<16x1xf32> to vector<16x32xf32>
    %310 = arith.mulf %300, %309 : vector<16x32xf32>
    %311 = vector.broadcast %292 : vector<1x32xf32> to vector<16x32xf32>
    %312 = arith.mulf %310, %311 : vector<16x32xf32>
    %313 = vector.broadcast %294 : vector<1x32xf32> to vector<16x32xf32>
    %314 = arith.addf %312, %313 : vector<16x32xf32>
    %315 = vector.extract_strided_slice %314 {offsets = [0, 0], sizes = [1, 32], strides = [1, 1]} : vector<16x32xf32> to vector<1x32xf32>
    %316 = vector.extract_strided_slice %314 {offsets = [8, 0], sizes = [1, 32], strides = [1, 1]} : vector<16x32xf32> to vector<1x32xf32>
    %317 = arith.subf %315, %316 : vector<1x32xf32>
    %318 = math.absf %317 : vector<1x32xf32>
    %c0_144 = arith.constant 0 : index
    %c0_145 = arith.constant 0 : index
    %319 = vector.load %arg17[%c0_144, %c0_145] : memref<96x3xf32, #tpu.memory_space<vmem>>, vector<96x3xf32>
    %320 = vector.extract_strided_slice %319 {offsets = [0, 0], sizes = [32, 3], strides = [1, 1]} : vector<96x3xf32> to vector<32x3xf32>
    %cst_146 = arith.constant dense<0.000000e+00> : vector<1x3xf32>
    %321 = tpu.matmul %315, %320, %cst_146 {dimension_numbers = #tpu.dot_dimension_numbers<[1], [0], [0], [1], [0, 0, 1, 1], [], []>} : vector<1x32xf32>, vector<32x3xf32>, vector<1x3xf32> -> vector<1x3xf32>
    %322 = vector.extract_strided_slice %319 {offsets = [32, 0], sizes = [32, 3], strides = [1, 1]} : vector<96x3xf32> to vector<32x3xf32>
    %cst_147 = arith.constant dense<0.000000e+00> : vector<1x3xf32>
    %323 = tpu.matmul %316, %322, %cst_147 {dimension_numbers = #tpu.dot_dimension_numbers<[1], [0], [0], [1], [0, 0, 1, 1], [], []>} : vector<1x32xf32>, vector<32x3xf32>, vector<1x3xf32> -> vector<1x3xf32>
    %324 = arith.addf %321, %323 : vector<1x3xf32>
    %325 = vector.extract_strided_slice %319 {offsets = [64, 0], sizes = [32, 3], strides = [1, 1]} : vector<96x3xf32> to vector<32x3xf32>
    %cst_148 = arith.constant dense<0.000000e+00> : vector<1x3xf32>
    %326 = tpu.matmul %318, %325, %cst_148 {dimension_numbers = #tpu.dot_dimension_numbers<[1], [0], [0], [1], [0, 0, 1, 1], [], []>} : vector<1x32xf32>, vector<32x3xf32>, vector<1x3xf32> -> vector<1x3xf32>
    %327 = arith.addf %324, %326 : vector<1x3xf32>
    %c0_149 = arith.constant 0 : index
    %c0_150 = arith.constant 0 : index
    %328 = vector.load %arg18[%c0_149, %c0_150] : memref<1x3xf32, #tpu.memory_space<vmem>>, vector<1x3xf32>
    %329 = arith.addf %327, %328 : vector<1x3xf32>
    %c0_151 = arith.constant 0 : index
    %c0_152 = arith.constant 0 : index
    %c0_153 = arith.constant 0 : index
    %330 = vector.load %arg19[%c0_151, %c0_152, %c0_153] : memref<1x2x32xf32, #tpu.memory_space<vmem>>, vector<1x1x32xf32>
    %331 = vector.shape_cast %330 : vector<1x1x32xf32> to vector<1x32xf32>
    %332 = vector.shape_cast %315 : vector<1x32xf32> to vector<1x1x32xf32>
    tpu.vector_store %arg19[%c0_151, %c0_152, %c0_153], %332 {strides = array<i32>} : memref<1x2x32xf32, #tpu.memory_space<vmem>>, vector<1x1x32xf32>,
    %c0_154 = arith.constant 0 : index
    %c1_155 = arith.constant 1 : index
    %c0_156 = arith.constant 0 : index
    %333 = vector.load %arg19[%c0_154, %c1_155, %c0_156] : memref<1x2x32xf32, #tpu.memory_space<vmem>>, vector<1x1x32xf32>
    %334 = vector.shape_cast %333 : vector<1x1x32xf32> to vector<1x32xf32>
    %335 = vector.shape_cast %316 : vector<1x32xf32> to vector<1x1x32xf32>
    tpu.vector_store %arg19[%c0_154, %c1_155, %c0_156], %335 {strides = array<i32>} : memref<1x2x32xf32, #tpu.memory_space<vmem>>, vector<1x1x32xf32>,
    %c0_157 = arith.constant 0 : index
    %c0_158 = arith.constant 0 : index
    %c0_159 = arith.constant 0 : index
    %336 = vector.load %arg20[%c0_157, %c0_158, %c0_159] : memref<1x1x3xf32, #tpu.memory_space<vmem>>, vector<1x1x3xf32>
    %337 = vector.shape_cast %336 : vector<1x1x3xf32> to vector<1x3xf32>
    %338 = vector.shape_cast %329 : vector<1x3xf32> to vector<1x1x3xf32>
    tpu.vector_store %arg20[%c0_157, %c0_158, %c0_159], %338 {strides = array<i32>} : memref<1x1x3xf32, #tpu.memory_space<vmem>>, vector<1x1x3xf32>,
    return
  }
  func.func @transform_0(%arg0: i32) -> (i32, i32, i32) {
    %c0_i32 = arith.constant 0 : i32
    %c0_i32_0 = arith.constant 0 : i32
    %c0_i32_1 = arith.constant 0 : i32
    return %arg0, %c0_i32, %c0_i32_0 : i32, i32, i32
  }
  func.func @transform_1(%arg0: i32) -> (i32, i32, i32) {
    %c0_i32 = arith.constant 0 : i32
    %c0_i32_0 = arith.constant 0 : i32
    %c0_i32_1 = arith.constant 0 : i32
    return %arg0, %c0_i32, %c0_i32_0 : i32, i32, i32
  }
  func.func @transform_2(%arg0: i32) -> (i32, i32) {
    %c0_i32 = arith.constant 0 : i32
    %c0_i32_0 = arith.constant 0 : i32
    %c0_i32_1 = arith.constant 0 : i32
    return %c0_i32, %c0_i32_0 : i32, i32
  }
  func.func @transform_3(%arg0: i32) -> (i32, i32) {
    %c0_i32 = arith.constant 0 : i32
    %c0_i32_0 = arith.constant 0 : i32
    %c0_i32_1 = arith.constant 0 : i32
    return %c0_i32, %c0_i32_0 : i32, i32
  }
  func.func @transform_4(%arg0: i32) -> (i32, i32, i32) {
    %c0_i32 = arith.constant 0 : i32
    %c0_i32_0 = arith.constant 0 : i32
    %c0_i32_1 = arith.constant 0 : i32
    %c0_i32_2 = arith.constant 0 : i32
    return %c0_i32, %c0_i32_0, %c0_i32_1 : i32, i32, i32
  }
  func.func @transform_5(%arg0: i32) -> (i32, i32, i32) {
    %c0_i32 = arith.constant 0 : i32
    %c0_i32_0 = arith.constant 0 : i32
    %c0_i32_1 = arith.constant 0 : i32
    %c0_i32_2 = arith.constant 0 : i32
    return %c0_i32, %c0_i32_0, %c0_i32_1 : i32, i32, i32
  }
  func.func @transform_6(%arg0: i32) -> (i32, i32, i32) {
    %c0_i32 = arith.constant 0 : i32
    %c0_i32_0 = arith.constant 0 : i32
    %c0_i32_1 = arith.constant 0 : i32
    %c0_i32_2 = arith.constant 0 : i32
    return %c0_i32, %c0_i32_0, %c0_i32_1 : i32, i32, i32
  }
  func.func @transform_7(%arg0: i32) -> (i32, i32, i32) {
    %c0_i32 = arith.constant 0 : i32
    %c0_i32_0 = arith.constant 0 : i32
    %c0_i32_1 = arith.constant 0 : i32
    %c0_i32_2 = arith.constant 0 : i32
    return %c0_i32, %c0_i32_0, %c0_i32_1 : i32, i32, i32
  }
  func.func @transform_8(%arg0: i32) -> (i32, i32, i32) {
    %c0_i32 = arith.constant 0 : i32
    %c0_i32_0 = arith.constant 0 : i32
    %c0_i32_1 = arith.constant 0 : i32
    %c0_i32_2 = arith.constant 0 : i32
    return %c0_i32, %c0_i32_0, %c0_i32_1 : i32, i32, i32
  }
  func.func @transform_9(%arg0: i32) -> (i32, i32, i32) {
    %c0_i32 = arith.constant 0 : i32
    %c0_i32_0 = arith.constant 0 : i32
    %c0_i32_1 = arith.constant 0 : i32
    %c0_i32_2 = arith.constant 0 : i32
    return %c0_i32, %c0_i32_0, %c0_i32_1 : i32, i32, i32
  }
  func.func @transform_10(%arg0: i32) -> (i32, i32, i32) {
    %c0_i32 = arith.constant 0 : i32
    %c0_i32_0 = arith.constant 0 : i32
    %c0_i32_1 = arith.constant 0 : i32
    %c0_i32_2 = arith.constant 0 : i32
    return %c0_i32, %c0_i32_0, %c0_i32_1 : i32, i32, i32
  }
  func.func @transform_11(%arg0: i32) -> (i32, i32, i32) {
    %c0_i32 = arith.constant 0 : i32
    %c0_i32_0 = arith.constant 0 : i32
    %c0_i32_1 = arith.constant 0 : i32
    %c0_i32_2 = arith.constant 0 : i32
    return %c0_i32, %c0_i32_0, %c0_i32_1 : i32, i32, i32
  }
  func.func @transform_12(%arg0: i32) -> (i32, i32, i32) {
    %c0_i32 = arith.constant 0 : i32
    %c0_i32_0 = arith.constant 0 : i32
    %c0_i32_1 = arith.constant 0 : i32
    %c0_i32_2 = arith.constant 0 : i32
    return %c0_i32, %c0_i32_0, %c0_i32_1 : i32, i32, i32
  }
  func.func @transform_13(%arg0: i32) -> (i32, i32, i32) {
    %c0_i32 = arith.constant 0 : i32
    %c0_i32_0 = arith.constant 0 : i32
    %c0_i32_1 = arith.constant 0 : i32
    %c0_i32_2 = arith.constant 0 : i32
    return %c0_i32, %c0_i32_0, %c0_i32_1 : i32, i32, i32
  }
  func.func @transform_14(%arg0: i32) -> (i32, i32, i32) {
    %c0_i32 = arith.constant 0 : i32
    %c0_i32_0 = arith.constant 0 : i32
    %c0_i32_1 = arith.constant 0 : i32
    %c0_i32_2 = arith.constant 0 : i32
    return %c0_i32, %c0_i32_0, %c0_i32_1 : i32, i32, i32
  }
  func.func @transform_15(%arg0: i32) -> (i32, i32, i32) {
    %c0_i32 = arith.constant 0 : i32
    %c0_i32_0 = arith.constant 0 : i32
    %c0_i32_1 = arith.constant 0 : i32
    %c0_i32_2 = arith.constant 0 : i32
    return %c0_i32, %c0_i32_0, %c0_i32_1 : i32, i32, i32
  }
  func.func @transform_16(%arg0: i32) -> (i32, i32) {
    %c0_i32 = arith.constant 0 : i32
    %c0_i32_0 = arith.constant 0 : i32
    %c0_i32_1 = arith.constant 0 : i32
    return %c0_i32, %c0_i32_0 : i32, i32
  }
  func.func @transform_17(%arg0: i32) -> (i32, i32) {
    %c0_i32 = arith.constant 0 : i32
    %c0_i32_0 = arith.constant 0 : i32
    %c0_i32_1 = arith.constant 0 : i32
    return %c0_i32, %c0_i32_0 : i32, i32
  }
  func.func @transform_18(%arg0: i32) -> (i32, i32, i32) {
    %c0_i32 = arith.constant 0 : i32
    %c0_i32_0 = arith.constant 0 : i32
    %c0_i32_1 = arith.constant 0 : i32
    return %arg0, %c0_i32, %c0_i32_0 : i32, i32, i32
  }
  func.func @transform_19(%arg0: i32) -> (i32, i32, i32) {
    %c0_i32 = arith.constant 0 : i32
    %c0_i32_0 = arith.constant 0 : i32
    %c0_i32_1 = arith.constant 0 : i32
    return %arg0, %c0_i32, %c0_i32_0 : i32, i32, i32
  }
}

</mosaic_0001>

<llo_original>
// kernel: siamese_bert_forward.1
$region0: #{siamese_bert_forward.1}
  #allocation0 [shape = 'u32[]', space=smem, size = 0x4, offset = 0x4, fixed_abs, tag = 'smem constant byte address 0x4 - core index']
  #allocation1 [shape = 'u32[72,128]{1,0:T(1,128)}', space=vmem, size = 0x9000, scoped, tag = 'internal scratch']
  %s0 = inlined_call_operand.vmem [shape: f32[2,16,32], index: 0, kind: input, shape index: {}]
  %s1 = inlined_call_operand.vmem [shape: s32[2,2,1], index: 1, kind: input, shape index: {}]
  %s2 = inlined_call_operand.vmem [shape: f32[1,32], index: 2, kind: input, shape index: {}]
  %s3 = inlined_call_operand.vmem [shape: f32[1,32], index: 3, kind: input, shape index: {}]
  %s4 = inlined_call_operand.vmem [shape: f32[2,32,96], index: 4, kind: input, shape index: {}]
  %s5 = inlined_call_operand.vmem [shape: f32[2,1,96], index: 5, kind: input, shape index: {}]
  %s6 = inlined_call_operand.vmem [shape: f32[2,32,32], index: 6, kind: input, shape index: {}]
  %s7 = inlined_call_operand.vmem [shape: f32[2,1,32], index: 7, kind: input, shape index: {}]
  %s8 = inlined_call_operand.vmem [shape: f32[2,1,32], index: 8, kind: input, shape index: {}]
  %s9 = inlined_call_operand.vmem [shape: f32[2,1,32], index: 9, kind: input, shape index: {}]
  %s10 = inlined_call_operand.vmem [shape: f32[2,32,64], index: 10, kind: input, shape index: {}]
  %s11 = inlined_call_operand.vmem [shape: f32[2,1,64], index: 11, kind: input, shape index: {}]
  %s12 = inlined_call_operand.vmem [shape: f32[2,64,32], index: 12, kind: input, shape index: {}]
  %s13 = inlined_call_operand.vmem [shape: f32[2,1,32], index: 13, kind: input, shape index: {}]
  %s14 = inlined_call_operand.vmem [shape: f32[2,1,32], index: 14, kind: input, shape index: {}]
  %s15 = inlined_call_operand.vmem [shape: f32[2,1,32], index: 15, kind: input, shape index: {}]
  %s16 = inlined_call_operand.vmem [shape: f32[96,3], index: 16, kind: input, shape index: {}]
  %s17 = inlined_call_operand.vmem [shape: f32[1,3], index: 17, kind: input, shape index: {}]
  %s18 = inlined_call_operand.vmem [shape: f32[2,2,32], index: 18, kind: output, shape index: {0}]
  %s19 = inlined_call_operand.vmem [shape: f32[2,1,3], index: 19, kind: output, shape index: {1}]
  %20 = xla_tuple %s18, %s19
  %s21 = sld [smem:[#allocation0]]
  $region113: #{siamese_bert_forward.1} parent=0
    _
  %s23 = ssub.s32 1, %s21
  %s24 = scalar_select 0, %s23, %s21
  loop: start=0, step=1, limit=4
  $region2: #{siamese_bert_forward.1} parent=0 // loop_pre_header
    _
  $region3: #{siamese_bert_forward.1} parent=0 // loop_header
    %s26 = sphi 0, %s30
    %p27 = scmp.ge.s32.totalorder %s26, 4
    %s36 = sphi 0, %s38
    %s39 = sphi 0, %s36
    %s40 = sphi 0, %s39
    %s56 = sphi 0, %s40
    %s62 = sphi 0, %s64
    %s65 = sphi 0, %s62
    %s66 = sphi 0, %s65
    %s82 = sphi 0, %s66
    %s86 = sphi 0, %s86
    %s88 = sphi 0, %s86
    %s89 = sphi 0, %s88
    %s103 = sphi 0, %s89
    %s107 = sphi 0, %s107
    %s109 = sphi 0, %s107
    %s110 = sphi 0, %s109
    %s124 = sphi 0, %s110
    %s128 = sphi 0, %s128
    %s130 = sphi 0, %s128
    %s131 = sphi 0, %s130
    %s145 = sphi 0, %s131
    %s149 = sphi 0, %s149
    %s151 = sphi 0, %s149
    %s152 = sphi 0, %s151
    %s166 = sphi 0, %s152
    %s170 = sphi 0, %s170
    %s172 = sphi 0, %s170
    %s173 = sphi 0, %s172
    %s187 = sphi 0, %s173
    %s191 = sphi 0, %s191
    %s193 = sphi 0, %s191
    %s194 = sphi 0, %s193
    %s208 = sphi 0, %s194
    %s212 = sphi 0, %s212
    %s214 = sphi 0, %s212
    %s215 = sphi 0, %s214
    %s229 = sphi 0, %s215
    %s233 = sphi 0, %s233
    %s235 = sphi 0, %s233
    %s236 = sphi 0, %s235
    %s250 = sphi 0, %s236
    %s254 = sphi 0, %s254
    %s256 = sphi 0, %s254
    %s257 = sphi 0, %s256
    %s271 = sphi 0, %s257
    %s275 = sphi 0, %s275
    %s277 = sphi 0, %s275
    %s278 = sphi 0, %s277
    %s292 = sphi 0, %s278
    %s296 = sphi 0, %s296
    %s298 = sphi 0, %s296
    %s299 = sphi 0, %s298
    %s313 = sphi 0, %s299
    %s317 = sphi 0, %s317
    %s319 = sphi 0, %s317
    %s320 = sphi 0, %s319
    %s334 = sphi 0, %s320
    %s338 = sphi 0, %s338
    %s340 = sphi 0, %s338
    %s341 = sphi 0, %s340
    %s355 = sphi 0, %s341
    %s359 = sphi 0, %s359
    %s361 = sphi 0, %s359
    %s362 = sphi 0, %s361
    %s376 = sphi 0, %s362
    %s380 = sphi 0, %s380
    %s382 = sphi 0, %s380
    %s383 = sphi 0, %s382
    %s397 = sphi 0, %s383
    %s401 = sphi 0, %s401
    %s403 = sphi 0, %s401
    %s404 = sphi 0, %s403
    %s418 = sphi 0, %s404
    %s424 = sphi 0, %s426
    %s427 = sphi 0, %s424
    %s428 = sphi 0, %s427
    %s444 = sphi 0, %s428
    %s450 = sphi 0, %s452
    %s453 = sphi 0, %s450
    %s454 = sphi 0, %s453
    %s470 = sphi 0, %s454
  $region4: #{siamese_bert_forward.1} parent=0 // loop_header_branch
    %29 = sbr.rel (%p27) target = $region8
  $region5: #{siamese_bert_forward.1} parent=0 // loop_body
    %s31 = ssub.s32 %s26, 1
    %s32 = ssub.s32 %s26, 2
    %s33 = sadd.s32 %s26, 1
    %s34 = ssub.s32 %s26, %s33
    %p35 = scmp.eq.s32.totalorder %s34, 0
    %s37 = sadd.s32 %s36, 1
    %s38 = scalar_select %p35, %s36, %s37
    %p41 = pneg %p35
    %p42 = scmp.eq.s32.totalorder %s26, 1
    %p43 = por %p41, %p42
    %p44 = scmp.ne.s32.totalorder %s36, %s39
    %p45 = scmp.eq.s32.totalorder %s26, 0
    %p46 = por %p44, %p45
    %p47 = scmp.ne.s32.totalorder %s36, %s39
    %p48 = scmp.eq.s32.totalorder %s31, 1
    %p49 = por %p47, %p48
    %p50 = scmp.ne.s32.totalorder %s39, %s40
    %p51 = scmp.eq.s32.totalorder %s31, 0
    %p52 = por %p50, %p51
    %p53 = scmp.ne.s32.totalorder %s39, %s40
    %p54 = scmp.eq.s32.totalorder %s32, 1
    %p55 = por %p53, %p54
    %p57 = scmp.ne.s32.totalorder %s40, %s56
    %p58 = scmp.eq.s32.totalorder %s32, 0
    %p59 = por %p57, %p58
    %s60 = ssub.s32 %s26, %s33
    %p61 = scmp.eq.s32.totalorder %s60, 0
    %s63 = sadd.s32 %s62, 1
    %s64 = scalar_select %p61, %s62, %s63
    %p67 = pneg %p61
    %p68 = scmp.eq.s32.totalorder %s26, 1
    %p69 = por %p67, %p68
    %p70 = scmp.ne.s32.totalorder %s62, %s65
    %p71 = scmp.eq.s32.totalorder %s26, 0
    %p72 = por %p70, %p71
    %p73 = scmp.ne.s32.totalorder %s62, %s65
    %p74 = scmp.eq.s32.totalorder %s31, 1
    %p75 = por %p73, %p74
    %p76 = scmp.ne.s32.totalorder %s65, %s66
    %p77 = scmp.eq.s32.totalorder %s31, 0
    %p78 = por %p76, %p77
    %p79 = scmp.ne.s32.totalorder %s65, %s66
    %p80 = scmp.eq.s32.totalorder %s32, 1
    %p81 = por %p79, %p80
    %p83 = scmp.ne.s32.totalorder %s66, %s82
    %p84 = scmp.eq.s32.totalorder %s32, 0
    %p85 = por %p83, %p84
    %s87 = sadd.s32 %s86, 1
    %p90 = scmp.eq.s32.totalorder %s26, 1
    %p91 = scmp.ne.s32.totalorder %s86, %s88
    %p92 = scmp.eq.s32.totalorder %s26, 0
    %p93 = por %p91, %p92
    %p94 = scmp.ne.s32.totalorder %s86, %s88
    %p95 = scmp.eq.s32.totalorder %s31, 1
    %p96 = por %p94, %p95
    %p97 = scmp.ne.s32.totalorder %s88, %s89
    %p98 = scmp.eq.s32.totalorder %s31, 0
    %p99 = por %p97, %p98
    %p100 = scmp.ne.s32.totalorder %s88, %s89
    %p101 = scmp.eq.s32.totalorder %s32, 1
    %p102 = por %p100, %p101
    %p104 = scmp.ne.s32.totalorder %s89, %s103
    %p105 = scmp.eq.s32.totalorder %s32, 0
    %p106 = por %p104, %p105
    %s108 = sadd.s32 %s107, 1
    %p111 = scmp.eq.s32.totalorder %s26, 1
    %p112 = scmp.ne.s32.totalorder %s107, %s109
    %p113 = scmp.eq.s32.totalorder %s26, 0
    %p114 = por %p112, %p113
    %p115 = scmp.ne.s32.totalorder %s107, %s109
    %p116 = scmp.eq.s32.totalorder %s31, 1
    %p117 = por %p115, %p116
    %p118 = scmp.ne.s32.totalorder %s109, %s110
    %p119 = scmp.eq.s32.totalorder %s31, 0
    %p120 = por %p118, %p119
    %p121 = scmp.ne.s32.totalorder %s109, %s110
    %p122 = scmp.eq.s32.totalorder %s32, 1
    %p123 = por %p121, %p122
    %p125 = scmp.ne.s32.totalorder %s110, %s124
    %p126 = scmp.eq.s32.totalorder %s32, 0
    %p127 = por %p125, %p126
    %s129 = sadd.s32 %s128, 1
    %p132 = scmp.eq.s32.totalorder %s26, 1
    %p133 = scmp.ne.s32.totalorder %s128, %s130
    %p134 = scmp.eq.s32.totalorder %s26, 0
    %p135 = por %p133, %p134
    %p136 = scmp.ne.s32.totalorder %s128, %s130
    %p137 = scmp.eq.s32.totalorder %s31, 1
    %p138 = por %p136, %p137
    %p139 = scmp.ne.s32.totalorder %s130, %s131
    %p140 = scmp.eq.s32.totalorder %s31, 0
    %p141 = por %p139, %p140
    %p142 = scmp.ne.s32.totalorder %s130, %s131
    %p143 = scmp.eq.s32.totalorder %s32, 1
    %p144 = por %p142, %p143
    %p146 = scmp.ne.s32.totalorder %s131, %s145
    %p147 = scmp.eq.s32.totalorder %s32, 0
    %p148 = por %p146, %p147
    %s150 = sadd.s32 %s149, 1
    %p153 = scmp.eq.s32.totalorder %s26, 1
    %p154 = scmp.ne.s32.totalorder %s149, %s151
    %p155 = scmp.eq.s32.totalorder %s26, 0
    %p156 = por %p154, %p155
    %p157 = scmp.ne.s32.totalorder %s149, %s151
    %p158 = scmp.eq.s32.totalorder %s31, 1
    %p159 = por %p157, %p158
    %p160 = scmp.ne.s32.totalorder %s151, %s152
    %p161 = scmp.eq.s32.totalorder %s31, 0
    %p162 = por %p160, %p161
    %p163 = scmp.ne.s32.totalorder %s151, %s152
    %p164 = scmp.eq.s32.totalorder %s32, 1
    %p165 = por %p163, %p164
    %p167 = scmp.ne.s32.totalorder %s152, %s166
    %p168 = scmp.eq.s32.totalorder %s32, 0
    %p169 = por %p167, %p168
    %s171 = sadd.s32 %s170, 1
    %p174 = scmp.eq.s32.totalorder %s26, 1
    %p175 = scmp.ne.s32.totalorder %s170, %s172
    %p176 = scmp.eq.s32.totalorder %s26, 0
    %p177 = por %p175, %p176
    %p178 = scmp.ne.s32.totalorder %s170, %s172
    %p179 = scmp.eq.s32.totalorder %s31, 1
    %p180 = por %p178, %p179
    %p181 = scmp.ne.s32.totalorder %s172, %s173
    %p182 = scmp.eq.s32.totalorder %s31, 0
    %p183 = por %p181, %p182
    %p184 = scmp.ne.s32.totalorder %s172, %s173
    %p185 = scmp.eq.s32.totalorder %s32, 1
    %p186 = por %p184, %p185
    %p188 = scmp.ne.s32.totalorder %s173, %s187
    %p189 = scmp.eq.s32.totalorder %s32, 0
    %p190 = por %p188, %p189
    %s192 = sadd.s32 %s191, 1
    %p195 = scmp.eq.s32.totalorder %s26, 1
    %p196 = scmp.ne.s32.totalorder %s191, %s193
    %p197 = scmp.eq.s32.totalorder %s26, 0
    %p198 = por %p196, %p197
    %p199 = scmp.ne.s32.totalorder %s191, %s193
    %p200 = scmp.eq.s32.totalorder %s31, 1
    %p201 = por %p199, %p200
    %p202 = scmp.ne.s32.totalorder %s193, %s194
    %p203 = scmp.eq.s32.totalorder %s31, 0
    %p204 = por %p202, %p203
    %p205 = scmp.ne.s32.totalorder %s193, %s194
    %p206 = scmp.eq.s32.totalorder %s32, 1
    %p207 = por %p205, %p206
    %p209 = scmp.ne.s32.totalorder %s194, %s208
    %p210 = scmp.eq.s32.totalorder %s32, 0
    %p211 = por %p209, %p210
    %s213 = sadd.s32 %s212, 1
    %p216 = scmp.eq.s32.totalorder %s26, 1
    %p217 = scmp.ne.s32.totalorder %s212, %s214
    %p218 = scmp.eq.s32.totalorder %s26, 0
    %p219 = por %p217, %p218
    %p220 = scmp.ne.s32.totalorder %s212, %s214
    %p221 = scmp.eq.s32.totalorder %s31, 1
    %p222 = por %p220, %p221
    %p223 = scmp.ne.s32.totalorder %s214, %s215
    %p224 = scmp.eq.s32.totalorder %s31, 0
    %p225 = por %p223, %p224
    %p226 = scmp.ne.s32.totalorder %s214, %s215
    %p227 = scmp.eq.s32.totalorder %s32, 1
    %p228 = por %p226, %p227
    %p230 = scmp.ne.s32.totalorder %s215, %s229
    %p231 = scmp.eq.s32.totalorder %s32, 0
    %p232 = por %p230, %p231
    %s234 = sadd.s32 %s233, 1
    %p237 = scmp.eq.s32.totalorder %s26, 1
    %p238 = scmp.ne.s32.totalorder %s233, %s235
    %p239 = scmp.eq.s32.totalorder %s26, 0
    %p240 = por %p238, %p239
    %p241 = scmp.ne.s32.totalorder %s233, %s235
    %p242 = scmp.eq.s32.totalorder %s31, 1
    %p243 = por %p241, %p242
    %p244 = scmp.ne.s32.totalorder %s235, %s236
    %p245 = scmp.eq.s32.totalorder %s31, 0
    %p246 = por %p244, %p245
    %p247 = scmp.ne.s32.totalorder %s235, %s236
    %p248 = scmp.eq.s32.totalorder %s32, 1
    %p249 = por %p247, %p248
    %p251 = scmp.ne.s32.totalorder %s236, %s250
    %p252 = scmp.eq.s32.totalorder %s32, 0
    %p253 = por %p251, %p252
    %s255 = sadd.s32 %s254, 1
    %p258 = scmp.eq.s32.totalorder %s26, 1
    %p259 = scmp.ne.s32.totalorder %s254, %s256
    %p260 = scmp.eq.s32.totalorder %s26, 0
    %p261 = por %p259, %p260
    %p262 = scmp.ne.s32.totalorder %s254, %s256
    %p263 = scmp.eq.s32.totalorder %s31, 1
    %p264 = por %p262, %p263
    %p265 = scmp.ne.s32.totalorder %s256, %s257
    %p266 = scmp.eq.s32.totalorder %s31, 0
    %p267 = por %p265, %p266
    %p268 = scmp.ne.s32.totalorder %s256, %s257
    %p269 = scmp.eq.s32.totalorder %s32, 1
    %p270 = por %p268, %p269
    %p272 = scmp.ne.s32.totalorder %s257, %s271
    %p273 = scmp.eq.s32.totalorder %s32, 0
    %p274 = por %p272, %p273
    %s276 = sadd.s32 %s275, 1
    %p279 = scmp.eq.s32.totalorder %s26, 1
    %p280 = scmp.ne.s32.totalorder %s275, %s277
    %p281 = scmp.eq.s32.totalorder %s26, 0
    %p282 = por %p280, %p281
    %p283 = scmp.ne.s32.totalorder %s275, %s277
    %p284 = scmp.eq.s32.totalorder %s31, 1
    %p285 = por %p283, %p284
    %p286 = scmp.ne.s32.totalorder %s277, %s278
    %p287 = scmp.eq.s32.totalorder %s31, 0
    %p288 = por %p286, %p287
    %p289 = scmp.ne.s32.totalorder %s277, %s278
    %p290 = scmp.eq.s32.totalorder %s32, 1
    %p291 = por %p289, %p290
    %p293 = scmp.ne.s32.totalorder %s278, %s292
    %p294 = scmp.eq.s32.totalorder %s32, 0
    %p295 = por %p293, %p294
    %s297 = sadd.s32 %s296, 1
    %p300 = scmp.eq.s32.totalorder %s26, 1
    %p301 = scmp.ne.s32.totalorder %s296, %s298
    %p302 = scmp.eq.s32.totalorder %s26, 0
    %p303 = por %p301, %p302
    %p304 = scmp.ne.s32.totalorder %s296, %s298
    %p305 = scmp.eq.s32.totalorder %s31, 1
    %p306 = por %p304, %p305
    %p307 = scmp.ne.s32.totalorder %s298, %s299
    %p308 = scmp.eq.s32.totalorder %s31, 0
    %p309 = por %p307, %p308
    %p310 = scmp.ne.s32.totalorder %s298, %s299
    %p311 = scmp.eq.s32.totalorder %s32, 1
    %p312 = por %p310, %p311
    %p314 = scmp.ne.s32.totalorder %s299, %s313
    %p315 = scmp.eq.s32.totalorder %s32, 0
    %p316 = por %p314, %p315
    %s318 = sadd.s32 %s317, 1
    %p321 = scmp.eq.s32.totalorder %s26, 1
    %p322 = scmp.ne.s32.totalorder %s317, %s319
    %p323 = scmp.eq.s32.totalorder %s26, 0
    %p324 = por %p322, %p323
    %p325 = scmp.ne.s32.totalorder %s317, %s319
    %p326 = scmp.eq.s32.totalorder %s31, 1
    %p327 = por %p325, %p326
    %p328 = scmp.ne.s32.totalorder %s319, %s320
    %p329 = scmp.eq.s32.totalorder %s31, 0
    %p330 = por %p328, %p329
    %p331 = scmp.ne.s32.totalorder %s319, %s320
    %p332 = scmp.eq.s32.totalorder %s32, 1
    %p333 = por %p331, %p332
    %p335 = scmp.ne.s32.totalorder %s320, %s334
    %p336 = scmp.eq.s32.totalorder %s32, 0
    %p337 = por %p335, %p336
    %s339 = sadd.s32 %s338, 1
    %p342 = scmp.eq.s32.totalorder %s26, 1
    %p343 = scmp.ne.s32.totalorder %s338, %s340
    %p344 = scmp.eq.s32.totalorder %s26, 0
    %p345 = por %p343, %p344
    %p346 = scmp.ne.s32.totalorder %s338, %s340
    %p347 = scmp.eq.s32.totalorder %s31, 1
    %p348 = por %p346, %p347
    %p349 = scmp.ne.s32.totalorder %s340, %s341
    %p350 = scmp.eq.s32.totalorder %s31, 0
    %p351 = por %p349, %p350
    %p352 = scmp.ne.s32.totalorder %s340, %s341
    %p353 = scmp.eq.s32.totalorder %s32, 1
    %p354 = por %p352, %p353
    %p356 = scmp.ne.s32.totalorder %s341, %s355
    %p357 = scmp.eq.s32.totalorder %s32, 0
    %p358 = por %p356, %p357
    %s360 = sadd.s32 %s359, 1
    %p363 = scmp.eq.s32.totalorder %s26, 1
    %p364 = scmp.ne.s32.totalorder %s359, %s361
    %p365 = scmp.eq.s32.totalorder %s26, 0
    %p366 = por %p364, %p365
    %p367 = scmp.ne.s32.totalorder %s359, %s361
    %p368 = scmp.eq.s32.totalorder %s31, 1
    %p369 = por %p367, %p368
    %p370 = scmp.ne.s32.totalorder %s361, %s362
    %p371 = scmp.eq.s32.totalorder %s31, 0
    %p372 = por %p370, %p371
    %p373 = scmp.ne.s32.totalorder %s361, %s362
    %p374 = scmp.eq.s32.totalorder %s32, 1
    %p375 = por %p373, %p374
    %p377 = scmp.ne.s32.totalorder %s362, %s376
    %p378 = scmp.eq.s32.totalorder %s32, 0
    %p379 = por %p377, %p378
    %s381 = sadd.s32 %s380, 1
    %p384 = scmp.eq.s32.totalorder %s26, 1
    %p385 = scmp.ne.s32.totalorder %s380, %s382
    %p386 = scmp.eq.s32.totalorder %s26, 0
    %p387 = por %p385, %p386
    %p388 = scmp.ne.s32.totalorder %s380, %s382
    %p389 = scmp.eq.s32.totalorder %s31, 1
    %p390 = por %p388, %p389
    %p391 = scmp.ne.s32.totalorder %s382, %s383
    %p392 = scmp.eq.s32.totalorder %s31, 0
    %p393 = por %p391, %p392
    %p394 = scmp.ne.s32.totalorder %s382, %s383
    %p395 = scmp.eq.s32.totalorder %s32, 1
    %p396 = por %p394, %p395
    %p398 = scmp.ne.s32.totalorder %s383, %s397
    %p399 = scmp.eq.s32.totalorder %s32, 0
    %p400 = por %p398, %p399
    %s402 = sadd.s32 %s401, 1
    %p405 = scmp.eq.s32.totalorder %s26, 1
    %p406 = scmp.ne.s32.totalorder %s401, %s403
    %p407 = scmp.eq.s32.totalorder %s26, 0
    %p408 = por %p406, %p407
    %p409 = scmp.ne.s32.totalorder %s401, %s403
    %p410 = scmp.eq.s32.totalorder %s31, 1
    %p411 = por %p409, %p410
    %p412 = scmp.ne.s32.totalorder %s403, %s404
    %p413 = scmp.eq.s32.totalorder %s31, 0
    %p414 = por %p412, %p413
    %p415 = scmp.ne.s32.totalorder %s403, %s404
    %p416 = scmp.eq.s32.totalorder %s32, 1
    %p417 = por %p415, %p416
    %p419 = scmp.ne.s32.totalorder %s404, %s418
    %p420 = scmp.eq.s32.totalorder %s32, 0
    %p421 = por %p419, %p420
    %s422 = ssub.s32 %s26, %s33
    %p423 = scmp.eq.s32.totalorder %s422, 0
    %s425 = sadd.s32 %s424, 1
    %s426 = scalar_select %p423, %s424, %s425
    %p429 = pneg %p423
    %p430 = scmp.eq.s32.totalorder %s26, 1
    %p431 = por %p429, %p430
    %p432 = scmp.ne.s32.totalorder %s424, %s427
    %p433 = scmp.eq.s32.totalorder %s26, 0
    %p434 = por %p432, %p433
    %p435 = scmp.ne.s32.totalorder %s424, %s427
    %p436 = scmp.eq.s32.totalorder %s31, 1
    %p437 = por %p435, %p436
    %p438 = scmp.ne.s32.totalorder %s427, %s428
    %p439 = scmp.eq.s32.totalorder %s31, 0
    %p440 = por %p438, %p439
    %p441 = scmp.ne.s32.totalorder %s427, %s428
    %p442 = scmp.eq.s32.totalorder %s32, 1
    %p443 = por %p441, %p442
    %p445 = scmp.ne.s32.totalorder %s428, %s444
    %p446 = scmp.eq.s32.totalorder %s32, 0
    %p447 = por %p445, %p446
    %s448 = ssub.s32 %s26, %s33
    %p449 = scmp.eq.s32.totalorder %s448, 0
    %s451 = sadd.s32 %s450, 1
    %s452 = scalar_select %p449, %s450, %s451
    %p455 = pneg %p449
    %p456 = scmp.eq.s32.totalorder %s26, 1
    %p457 = por %p455, %p456
    %p458 = scmp.ne.s32.totalorder %s450, %s453
    %p459 = scmp.eq.s32.totalorder %s26, 0
    %p460 = por %p458, %p459
    %p461 = scmp.ne.s32.totalorder %s450, %s453
    %p462 = scmp.eq.s32.totalorder %s31, 1
    %p463 = por %p461, %p462
    %p464 = scmp.ne.s32.totalorder %s453, %s454
    %p465 = scmp.eq.s32.totalorder %s31, 0
    %p466 = por %p464, %p465
    %p467 = scmp.ne.s32.totalorder %s453, %s454
    %p468 = scmp.eq.s32.totalorder %s32, 1
    %p469 = por %p467, %p468
    %p471 = scmp.ne.s32.totalorder %s454, %s470
    %p472 = scmp.eq.s32.totalorder %s32, 0
    %p473 = por %p471, %p472
    %p474 = scmp.le.s32.totalorder 1, %s26
    %p475 = scmp.lt.s32.totalorder %s26, 3
    %p476 = pnand %p474, %p475
    %p477 = pneg %p476
    // Predicated region
    $region9: #{siamese_bert_forward.1} parent=5 // pred_check
      _
    $region10: #{siamese_bert_forward.1} parent=5 // pred_check_branch
      %479 = sbr.rel (%p476) target = $region12
    $region11: #{siamese_bert_forward.1} parent=5 // pred_region
      %s480 = ssub.s32 %s26, 1
      // Predicated region
      $region13: #{siamese_bert_forward.1} parent=11 // pred_check
        %p481 = pneg %p99
      $region14: #{siamese_bert_forward.1} parent=11 // pred_check_branch
        %483 = sbr.rel (%p481) target = $region16
      $region15: #{siamese_bert_forward.1} parent=11 // pred_region
        _
      $region16: #{siamese_bert_forward.1} parent=11 // pred_fallthru
        _
      // Predicated region
      $region17: #{siamese_bert_forward.1} parent=11 // pred_check
        %p484 = pneg %p120
      $region18: #{siamese_bert_forward.1} parent=11 // pred_check_branch
        %486 = sbr.rel (%p484) target = $region20
      $region19: #{siamese_bert_forward.1} parent=11 // pred_region
        _
      $region20: #{siamese_bert_forward.1} parent=11 // pred_fallthru
        _
      // Predicated region
      $region21: #{siamese_bert_forward.1} parent=11 // pred_check
        %p487 = pneg %p141
      $region22: #{siamese_bert_forward.1} parent=11 // pred_check_branch
        %489 = sbr.rel (%p487) target = $region24
      $region23: #{siamese_bert_forward.1} parent=11 // pred_region
        _
      $region24: #{siamese_bert_forward.1} parent=11 // pred_fallthru
        _
      // Predicated region
      $region25: #{siamese_bert_forward.1} parent=11 // pred_check
        %p490 = pneg %p162
      $region26: #{siamese_bert_forward.1} parent=11 // pred_check_branch
        %492 = sbr.rel (%p490) target = $region28
      $region27: #{siamese_bert_forward.1} parent=11 // pred_region
        _
      $region28: #{siamese_bert_forward.1} parent=11 // pred_fallthru
        _
      // Predicated region
      $region29: #{siamese_bert_forward.1} parent=11 // pred_check
        %p493 = pneg %p183
      $region30: #{siamese_bert_forward.1} parent=11 // pred_check_branch
        %495 = sbr.rel (%p493) target = $region32
      $region31: #{siamese_bert_forward.1} parent=11 // pred_region
        _
      $region32: #{siamese_bert_forward.1} parent=11 // pred_fallthru
        _
      // Predicated region
      $region33: #{siamese_bert_forward.1} parent=11 // pred_check
        %p496 = pneg %p204
      $region34: #{siamese_bert_forward.1} parent=11 // pred_check_branch
        %498 = sbr.rel (%p496) target = $region36
      $region35: #{siamese_bert_forward.1} parent=11 // pred_region
        _
      $region36: #{siamese_bert_forward.1} parent=11 // pred_fallthru
        _
      // Predicated region
      $region37: #{siamese_bert_forward.1} parent=11 // pred_check
        %p499 = pneg %p225
      $region38: #{siamese_bert_forward.1} parent=11 // pred_check_branch
        %501 = sbr.rel (%p499) target = $region40
      $region39: #{siamese_bert_forward.1} parent=11 // pred_region
        _
      $region40: #{siamese_bert_forward.1} parent=11 // pred_fallthru
        _
      // Predicated region
      $region41: #{siamese_bert_forward.1} parent=11 // pred_check
        %p502 = pneg %p246
      $region42: #{siamese_bert_forward.1} parent=11 // pred_check_branch
        %504 = sbr.rel (%p502) target = $region44
      $region43: #{siamese_bert_forward.1} parent=11 // pred_region
        _
      $region44: #{siamese_bert_forward.1} parent=11 // pred_fallthru
        _
      // Predicated region
      $region45: #{siamese_bert_forward.1} parent=11 // pred_check
        %p505 = pneg %p267
      $region46: #{siamese_bert_forward.1} parent=11 // pred_check_branch
        %507 = sbr.rel (%p505) target = $region48
      $region47: #{siamese_bert_forward.1} parent=11 // pred_region
        _
      $region48: #{siamese_bert_forward.1} parent=11 // pred_fallthru
        _
      // Predicated region
      $region49: #{siamese_bert_forward.1} parent=11 // pred_check
        %p508 = pneg %p288
      $region50: #{siamese_bert_forward.1} parent=11 // pred_check_branch
        %510 = sbr.rel (%p508) target = $region52
      $region51: #{siamese_bert_forward.1} parent=11 // pred_region
        _
      $region52: #{siamese_bert_forward.1} parent=11 // pred_fallthru
        _
      // Predicated region
      $region53: #{siamese_bert_forward.1} parent=11 // pred_check
        %p511 = pneg %p309
      $region54: #{siamese_bert_forward.1} parent=11 // pred_check_branch
        %513 = sbr.rel (%p511) target = $region56
      $region55: #{siamese_bert_forward.1} parent=11 // pred_region
        _
      $region56: #{siamese_bert_forward.1} parent=11 // pred_fallthru
        _
      // Predicated region
      $region57: #{siamese_bert_forward.1} parent=11 // pred_check
        %p514 = pneg %p330
      $region58: #{siamese_bert_forward.1} parent=11 // pred_check_branch
        %516 = sbr.rel (%p514) target = $region60
      $region59: #{siamese_bert_forward.1} parent=11 // pred_region
        _
      $region60: #{siamese_bert_forward.1} parent=11 // pred_fallthru
        _
      // Predicated region
      $region61: #{siamese_bert_forward.1} parent=11 // pred_check
        %p517 = pneg %p351
      $region62: #{siamese_bert_forward.1} parent=11 // pred_check_branch
        %519 = sbr.rel (%p517) target = $region64
      $region63: #{siamese_bert_forward.1} parent=11 // pred_region
        _
      $region64: #{siamese_bert_forward.1} parent=11 // pred_fallthru
        _
      // Predicated region
      $region65: #{siamese_bert_forward.1} parent=11 // pred_check
        %p520 = pneg %p372
      $region66: #{siamese_bert_forward.1} parent=11 // pred_check_branch
        %522 = sbr.rel (%p520) target = $region68
      $region67: #{siamese_bert_forward.1} parent=11 // pred_region
        _
      $region68: #{siamese_bert_forward.1} parent=11 // pred_fallthru
        _
      // Predicated region
      $region69: #{siamese_bert_forward.1} parent=11 // pred_check
        %p523 = pneg %p393
      $region70: #{siamese_bert_forward.1} parent=11 // pred_check_branch
        %525 = sbr.rel (%p523) target = $region72
      $region71: #{siamese_bert_forward.1} parent=11 // pred_region
        _
      $region72: #{siamese_bert_forward.1} parent=11 // pred_fallthru
        _
      // Predicated region
      $region73: #{siamese_bert_forward.1} parent=11 // pred_check
        %p526 = pneg %p414
      $region74: #{siamese_bert_forward.1} parent=11 // pred_check_branch
        %528 = sbr.rel (%p526) target = $region76
      $region75: #{siamese_bert_forward.1} parent=11 // pred_region
        _
      $region76: #{siamese_bert_forward.1} parent=11 // pred_fallthru
        _
    $region12: #{siamese_bert_forward.1} parent=5 // pred_fallthru
      _
    %p529 = scmp.lt.s32.totalorder %s26, 2
    // Predicated region
    $region77: #{siamese_bert_forward.1} parent=5 // pred_check
      %p530 = pneg %p529
    $region78: #{siamese_bert_forward.1} parent=5 // pred_check_branch
      %532 = sbr.rel (%p530) target = $region80
    $region79: #{siamese_bert_forward.1} parent=5 // pred_region
      // Predicated region
      $region81: #{siamese_bert_forward.1} parent=79 // pred_check
        %p533 = pneg %p46
      $region82: #{siamese_bert_forward.1} parent=79 // pred_check_branch
        %535 = sbr.rel (%p533) target = $region84
      $region83: #{siamese_bert_forward.1} parent=79 // pred_region
        %p536 = scmp.lt.s32.totalorder %s26, 1
        %s537 = scalar_select %p536, %s26, 1
        %s538 = smul.addr %s537, 2
        %s539 = smul.addr %s538, 8
        %s540 = scalar_lea.vmem %s0, %s539
      $region84: #{siamese_bert_forward.1} parent=79 // pred_fallthru
        _
      // Predicated region
      $region85: #{siamese_bert_forward.1} parent=79 // pred_check
        %p541 = pneg %p72
      $region86: #{siamese_bert_forward.1} parent=79 // pred_check_branch
        %543 = sbr.rel (%p541) target = $region88
      $region87: #{siamese_bert_forward.1} parent=79 // pred_region
        %p544 = scmp.lt.s32.totalorder %s26, 1
        %s545 = scalar_select %p544, %s26, 1
        %s546 = smul.addr %s545, 2
        %s547 = scalar_lea.vmem %s1, %s546
      $region88: #{siamese_bert_forward.1} parent=79 // pred_fallthru
        _
    $region80: #{siamese_bert_forward.1} parent=5 // pred_fallthru
      _
    %p548 = scmp.le.s32.totalorder 1, %s26
    %p549 = scmp.lt.s32.totalorder %s26, 3
    %p550 = pnand %p548, %p549
    %p551 = pneg %p550
    // Predicated region
    $region89: #{siamese_bert_forward.1} parent=5 // pred_check
      _
    $region90: #{siamese_bert_forward.1} parent=5 // pred_check_branch
      %553 = sbr.rel (%p550) target = $region92
    $region91: #{siamese_bert_forward.1} parent=5 // pred_region
      %s554 = ssub.s32 %s26, 1
      %p555 = scmp.lt.s32.totalorder %s31, 1
      %s556 = scalar_select %p555, %s31, 1
      %s557 = smul.addr %s556, 2
      %s558 = smul.addr %s557, 8
      %s559 = scalar_lea.vmem %s0, %s558
      %p560 = pneg %p52
      %p561 = pneg %p49
      %p562 = scmp.lt.s32.totalorder %s31, 1
      %s563 = scalar_select %p562, %s31, 1
      %s564 = smul.addr %s563, 2
      %s565 = scalar_lea.vmem %s1, %s564
      %p566 = pneg %p78
      %p567 = pneg %p75
      %p568 = pneg %p99
      %p569 = pneg %p96
      %p570 = pneg %p120
      %p571 = pneg %p117
      %p572 = pneg %p141
      %p573 = pneg %p138
      %p574 = pneg %p162
      %p575 = pneg %p159
      %p576 = pneg %p183
      %p577 = pneg %p180
      %p578 = pneg %p204
      %p579 = pneg %p201
      %p580 = pneg %p225
      %p581 = pneg %p222
      %p582 = pneg %p246
      %p583 = pneg %p243
      %p584 = pneg %p267
      %p585 = pneg %p264
      %p586 = pneg %p288
      %p587 = pneg %p285
      %p588 = pneg %p309
      %p589 = pneg %p306
      %p590 = pneg %p330
      %p591 = pneg %p327
      %p592 = pneg %p351
      %p593 = pneg %p348
      %p594 = pneg %p372
      %p595 = pneg %p369
      %p596 = pneg %p393
      %p597 = pneg %p390
      %p598 = pneg %p414
      %p599 = pneg %p411
      %p600 = pneg %p440
      %p601 = pneg %p437
      %p602 = scmp.lt.s32.totalorder %s31, 1
      %s603 = scalar_select %p602, %s31, 1
      %s604 = smul.addr %s603, 2
      %s605 = scalar_lea.vmem %s18, %s604
      %p606 = pneg %p466
      %p607 = pneg %p463
      %p608 = scmp.lt.s32.totalorder %s31, 1
      %s609 = scalar_select %p608, %s31, 1
      %s610 = scalar_lea.vmem %s19, %s609
      %p611 = scmp.lt.s32.totalorder %s31, 1
      %s612 = scalar_select %p611, %s31, 1
      %s613 = smul.addr %s612, 2
      %s614 = smul.addr %s613, 8
      %s615 = scalar_lea.vmem %s0, %s614
      %p616 = scmp.lt.s32.totalorder %s31, 1
      %s617 = scalar_select %p616, %s31, 1
      %s618 = smul.addr %s617, 2
      %s619 = scalar_lea.vmem %s1, %s618
      %p620 = scmp.lt.s32.totalorder %s31, 1
      %s621 = scalar_select %p620, %s31, 1
      %s622 = smul.addr %s621, 2
      %s623 = scalar_lea.vmem %s18, %s622
      %p624 = scmp.lt.s32.totalorder %s31, 1
      %s625 = scalar_select %p624, %s31, 1
      %s626 = scalar_lea.vmem %s19, %s625
      %v627 = vld [vmem:[%s615] sm:$0xff]
      %v628 = vld [vmem:[%s615 + $0x8] sm:$0xff]
      %v629 = vld [vmem:[%s2] sm:$0x1]
      %v630 = vld [vmem:[%s3] sm:$0x1]
      %vm631 = vcmask 261120
      %v632 = vsel %vm631, %v627, 0.0
      %633 = vadd.xlane.f32.xlu0 %v632
      %v634 = vpop.xlane.xlu0 %633
      %v635 = vsel %vm631, %v628, 0.0
      %636 = vadd.xlane.f32.xlu0 %v635
      %v637 = vpop.xlane.xlu0 %636
      %v638 = vrcp.pop 32.0
      %v639 = vmul.f32 32.0, %v638
      %v640 = vsub.f32 1.0, %v639
      %v641 = vmul.f32 %v638, %v640
      %v642 = vadd.f32 %v638, %v641
      %vm643 = vweird.f32 %v638
      %v644 = vsel %vm643, %v638, %v642
      %v645 = vmul.f32 %v634, %v644
      %v646 = vmul.f32 %v637, %v644
      %v647 = vsub.f32 %v627, %v645
      %v648 = vsub.f32 %v628, %v646
      %v649 = vmul.f32 %v647, %v647
      %v650 = vmul.f32 %v648, %v648
      %v651 = vsel %vm631, %v649, 0.0
      %652 = vadd.xlane.f32.xlu0 %v651
      %v653 = vpop.xlane.xlu0 %652
      %v654 = vsel %vm631, %v650, 0.0
      %655 = vadd.xlane.f32.xlu0 %v654
      %v656 = vpop.xlane.xlu0 %655
      %v657 = vmul.f32 %v653, %v644
      %v658 = vmul.f32 %v656, %v644
      %v659 = vadd.f32 %v657, 1e-12
      %v660 = vadd.f32 %v658, 1e-12
      %v661 = vrsqrt.pop %v659
      %v662 = vmul.f32 %v661, %v659
      %v663 = vmul.f32 %v662, %v661
      %v664 = vmul.f32 0.5, %v663
      %v665 = vsub.f32 1.5, %v664
      %v666 = vmul.f32 %v661, %v665
      %vm667 = vweird.f32 %v659
      %vm668 = vweird.f32 %v661
      %vm669 = vmor %vm667, %vm668
      %v670 = vsel %vm669, %v661, %v666
      %v671 = vrsqrt.pop %v660
      %v672 = vmul.f32 %v671, %v660
      %v673 = vmul.f32 %v672, %v671
      %v674 = vmul.f32 0.5, %v673
      %v675 = vsub.f32 1.5, %v674
      %v676 = vmul.f32 %v671, %v675
      %vm677 = vweird.f32 %v660
      %vm678 = vweird.f32 %v671
      %vm679 = vmor %vm677, %vm678
      %v680 = vsel %vm679, %v671, %v676
      %v681 = vmul.f32 %v647, %v670
      %v682 = vmul.f32 %v648, %v680
      %v684 = vperm.slane %v629, 0
      %v686 = vmul.f32 %v681, %v684
      %v687 = vmul.f32 %v682, %v684
      %v689 = vperm.slane %v630, 0
      %v691 = vadd.f32 %v686, %v689
      %v692 = vadd.f32 %v687, %v689
      %v693 = vlaneseq
      %v694 = vand.u32 %v693, 127
      %v695 = vld [vmem:[%s619] sm:$0x3]
      %v696 = vrot.slane %v695, 1
      %697 = vset.pattern.permute.xlu0 0
      %698 = vperm.xlu0 %697, %v695
      %v699 = vpop.permute.xlu0 %698
      %v700 = vperm.slane %v699, 0
      %701 = vset.pattern.permute.xlu0 0
      %702 = vperm.xlu0 %701, %v696
      %v703 = vpop.permute.xlu0 %702
      %v704 = vperm.slane %v703, 0
      %vm705 = vcmp.lt.s32.totalorder %v694, %v700
      %vm706 = vcmp.lt.s32.totalorder %v694, %v704
      %v707 = vsel %vm705, 0.0, -1e+09
      %v708 = vsel %vm706, 0.0, -1e+09
      %v709 = vld [vmem:[%s4] sm:$0xff]
      %v710 = vld [vmem:[%s4 + $0x8] sm:$0xff]
      %v711 = vld [vmem:[%s4 + $0x10] sm:$0xff]
      %v712 = vld [vmem:[%s4 + $0x18] sm:$0xff]
      %v713 = vld [vmem:[%s5] sm:$0x1]
      %v715 = vperm.slane %v713, 0
      %v718 = vsel %vm631, %v691, 0
      %v721 = vsel %vm631, %v692, 0
      %723 = vmatpush.msra.mxu0 0.0
      %724 = vmatpush.msra.mxu0 0.0
      %725 = vmatpush.msra.mxu0 0.0
      %726 = vmatpush.msra.mxu0 0.0
      %727 = vmatpush.msra.mxu0 0.0
      %728 = vmatpush.msra.mxu0 0.0
      %729 = vmatpush.msra.mxu0 0.0
      %730 = vmatpush.msra.mxu0 0.0
      %731 = vmatpush.msra.mxu0 0.0
      %732 = vmatpush.msra.mxu0 0.0
      %733 = vmatpush.msra.mxu0 0.0
      %734 = vmatpush.msra.mxu0 0.0
      %735 = vmatpush.msra.mxu0 %v712
      %736 = vmatpush.msra.mxu0 %v711
      %737 = vmatpush.msra.mxu0 %v710
      %738 = vmatpush.msra.mxu0 %v709
      %739 = vmatmul.f32.gmra.mxu0 %v718
      %v740 = vpop.f32.mrf.mxu0
      %v741 = vadd.f32 %v715, %v740
      %742 = vmatmul.f32.gmra.mxu0 %v721
      %v743 = vpop.f32.mrf.mxu0
      %v744 = vadd.f32 %v715, %v743
      %745 = vdwg.mxu0
      %v746 = vld [vmem:[%s6] sm:$0xff]
      %v747 = vld [vmem:[%s6 + $0x8] sm:$0xff]
      %v748 = vld [vmem:[%s6 + $0x10] sm:$0xff]
      %v749 = vld [vmem:[%s6 + $0x18] sm:$0xff]
      %v750 = vld [vmem:[%s7] sm:$0x1]
      %752 = vrot.lane.b32.xlu0 %v741, 96
      %v753 = vpop.permute.xlu0 %752
      %vm754 = vcmask 130048
      %v755 = vsel %vm754, %v741, 0
      %v757 = vsel %vm754, %v753, 0
      %759 = vmatpush.xpose.msra.mxu0 0.0
      %760 = vmatpush.xpose.msra.mxu0 0.0
      %761 = vmatpush.xpose.msra.mxu0 0.0
      %762 = vmatpush.xpose.msra.mxu0 0.0
      %763 = vmatpush.xpose.msra.mxu0 0.0
      %764 = vmatpush.xpose.msra.mxu0 0.0
      %765 = vmatpush.xpose.msra.mxu0 0.0
      %766 = vmatpush.xpose.msra.mxu0 0.0
      %767 = vmatpush.xpose.msra.mxu0 0.0
      %768 = vmatpush.xpose.msra.mxu0 0.0
      %769 = vmatpush.xpose.msra.mxu0 0.0
      %770 = vmatpush.xpose.msra.mxu0 0.0
      %771 = vmatpush.xpose.msra.mxu0 0.0
      %772 = vmatpush.xpose.msra.mxu0 0.0
      %773 = vmatpush.xpose.msra.mxu0 0.0
      %774 = vmatpush.xpose.msra.mxu0 %v757
      %775 = vmatmul.f32.gmra.mxu0 %v755
      %v776 = vpop.f32.mrf.mxu0
      %v777 = vadd.f32 0.0, %v776
      %778 = vdwg.mxu0
      %780 = vrot.lane.b32.xlu0 %v744, 96
      %v781 = vpop.permute.xlu0 %780
      %v782 = vsel %vm754, %v744, 0
      %v784 = vsel %vm754, %v781, 0
      %786 = vmatpush.xpose.msra.mxu0 0.0
      %787 = vmatpush.xpose.msra.mxu0 0.0
      %788 = vmatpush.xpose.msra.mxu0 0.0
      %789 = vmatpush.xpose.msra.mxu0 0.0
      %790 = vmatpush.xpose.msra.mxu0 0.0
      %791 = vmatpush.xpose.msra.mxu0 0.0
      %792 = vmatpush.xpose.msra.mxu0 0.0
      %793 = vmatpush.xpose.msra.mxu0 0.0
      %794 = vmatpush.xpose.msra.mxu0 0.0
      %795 = vmatpush.xpose.msra.mxu0 0.0
      %796 = vmatpush.xpose.msra.mxu0 0.0
      %797 = vmatpush.xpose.msra.mxu0 0.0
      %798 = vmatpush.xpose.msra.mxu0 0.0
      %799 = vmatpush.xpose.msra.mxu0 0.0
      %800 = vmatpush.xpose.msra.mxu0 0.0
      %801 = vmatpush.xpose.msra.mxu0 %v784
      %802 = vmatmul.f32.gmra.mxu0 %v782
      %v803 = vpop.f32.mrf.mxu0
      %v804 = vadd.f32 0.0, %v803
      %805 = vdwg.mxu0
      %v806 = vmul.f32 %v777, 0.25
      %v807 = vmul.f32 %v804, 0.25
      %v808 = vadd.f32 %v806, %v707
      %v809 = vadd.f32 %v807, %v708
      %vm810 = vcmask 64512
      %v811 = vsel %vm810, %v808, -inf
      %812 = vmax.xlane.f32.xlu0 %v811
      %v813 = vpop.xlane.xlu0 %812
      %v814 = vsel %vm810, %v809, -inf
      %815 = vmax.xlane.f32.xlu0 %v814
      %v816 = vpop.xlane.xlu0 %815
      %v817 = vsub.f32 %v808, %v813
      %v818 = vsub.f32 %v809, %v816
      %v819 = vmul.f32 %v817, 1.442695
      %v820 = vpow.pop %v819
      %v821 = vmul.f32 %v818, 1.442695
      %v822 = vpow.pop %v821
      %v823 = vsel %vm810, %v820, 0.0
      %824 = vadd.xlane.f32.xlu0 %v823
      %v825 = vpop.xlane.xlu0 %824
      %v826 = vsel %vm810, %v822, 0.0
      %827 = vadd.xlane.f32.xlu0 %v826
      %v828 = vpop.xlane.xlu0 %827
      %v829 = vrcp.pop %v825
      %v830 = vrcp.pop %v828
      %v831 = vmul.f32 %v820, %v829
      %v832 = vmul.f32 %v822, %v830
      %833 = vrot.lane.b32.xlu0 %v741, 64
      %v834 = vpop.permute.xlu0 %833
      %v837 = vsel %vm810, %v831, 0
      %839 = vmatpush.msra.mxu0 0.0
      %840 = vmatpush.msra.mxu0 0.0
      %841 = vmatpush.msra.mxu0 0.0
      %842 = vmatpush.msra.mxu0 0.0
      %843 = vmatpush.msra.mxu0 0.0
      %844 = vmatpush.msra.mxu0 0.0
      %845 = vmatpush.msra.mxu0 0.0
      %846 = vmatpush.msra.mxu0 0.0
      %847 = vmatpush.msra.mxu0 0.0
      %848 = vmatpush.msra.mxu0 0.0
      %849 = vmatpush.msra.mxu0 0.0
      %850 = vmatpush.msra.mxu0 0.0
      %851 = vmatpush.msra.mxu0 0.0
      %852 = vmatpush.msra.mxu0 0.0
      %853 = vmatpush.msra.mxu0 0.0
      %854 = vmatpush.msra.mxu0 %v834
      %855 = vmatmul.f32.gmra.mxu0 %v837
      %v856 = vpop.f32.mrf.mxu0
      %v857 = vadd.f32 0.0, %v856
      %858 = vdwg.mxu0
      %859 = vrot.lane.b32.xlu0 %v744, 64
      %v860 = vpop.permute.xlu0 %859
      %v863 = vsel %vm810, %v832, 0
      %865 = vmatpush.msra.mxu0 0.0
      %866 = vmatpush.msra.mxu0 0.0
      %867 = vmatpush.msra.mxu0 0.0
      %868 = vmatpush.msra.mxu0 0.0
      %869 = vmatpush.msra.mxu0 0.0
      %870 = vmatpush.msra.mxu0 0.0
      %871 = vmatpush.msra.mxu0 0.0
      %872 = vmatpush.msra.mxu0 0.0
      %873 = vmatpush.msra.mxu0 0.0
      %874 = vmatpush.msra.mxu0 0.0
      %875 = vmatpush.msra.mxu0 0.0
      %876 = vmatpush.msra.mxu0 0.0
      %877 = vmatpush.msra.mxu0 0.0
      %878 = vmatpush.msra.mxu0 0.0
      %879 = vmatpush.msra.mxu0 0.0
      %880 = vmatpush.msra.mxu0 %v860
      %881 = vmatmul.f32.gmra.mxu0 %v863
      %v882 = vpop.f32.mrf.mxu0
      %v883 = vadd.f32 0.0, %v882
      %884 = vdwg.mxu0
      %v886 = vsel %vm754, %v857, 0
      %v889 = vsel %vm754, %v883, 0
      %891 = vmatpush.msra.mxu0 0.0
      %892 = vmatpush.msra.mxu0 0.0
      %893 = vmatpush.msra.mxu0 0.0
      %894 = vmatpush.msra.mxu0 0.0
      %895 = vmatpush.msra.mxu0 0.0
      %896 = vmatpush.msra.mxu0 0.0
      %897 = vmatpush.msra.mxu0 0.0
      %898 = vmatpush.msra.mxu0 0.0
      %899 = vmatpush.msra.mxu0 0.0
      %900 = vmatpush.msra.mxu0 0.0
      %901 = vmatpush.msra.mxu0 0.0
      %902 = vmatpush.msra.mxu0 0.0
      %903 = vmatpush.msra.mxu0 0.0
      %904 = vmatpush.msra.mxu0 0.0
      %905 = vmatpush.msra.mxu0 %v747
      %906 = vmatpush.msra.mxu0 %v746
      %907 = vmatmul.f32.gmra.mxu0 %v886
      %v908 = vpop.f32.mrf.mxu0
      %v909 = vadd.f32 0.0, %v908
      %910 = vmatmul.f32.gmra.mxu0 %v889
      %v911 = vpop.f32.mrf.mxu0
      %v912 = vadd.f32 0.0, %v911
      %913 = vdwg.mxu0
      %v915 = vperm.slane %v750, 0
      %v917 = vadd.f32 %v915, %v909
      %v918 = vadd.f32 %v915, %v912
      %919 = vrot.lane.b32.xlu0 %v741, 112
      %v920 = vpop.permute.xlu0 %919
      %921 = vrot.lane.b32.xlu0 %v741, 80
      %v922 = vpop.permute.xlu0 %921
      %v923 = vsel %vm754, %v920, 0
      %v925 = vsel %vm754, %v922, 0
      %927 = vmatpush.xpose.msra.mxu0 0.0
      %928 = vmatpush.xpose.msra.mxu0 0.0
      %929 = vmatpush.xpose.msra.mxu0 0.0
      %930 = vmatpush.xpose.msra.mxu0 0.0
      %931 = vmatpush.xpose.msra.mxu0 0.0
      %932 = vmatpush.xpose.msra.mxu0 0.0
      %933 = vmatpush.xpose.msra.mxu0 0.0
      %934 = vmatpush.xpose.msra.mxu0 0.0
      %935 = vmatpush.xpose.msra.mxu0 0.0
      %936 = vmatpush.xpose.msra.mxu0 0.0
      %937 = vmatpush.xpose.msra.mxu0 0.0
      %938 = vmatpush.xpose.msra.mxu0 0.0
      %939 = vmatpush.xpose.msra.mxu0 0.0
      %940 = vmatpush.xpose.msra.mxu0 0.0
      %941 = vmatpush.xpose.msra.mxu0 0.0
      %942 = vmatpush.xpose.msra.mxu0 %v925
      %943 = vmatmul.f32.gmra.mxu0 %v923
      %v944 = vpop.f32.mrf.mxu0
      %v945 = vadd.f32 0.0, %v944
      %946 = vdwg.mxu0
      %947 = vrot.lane.b32.xlu0 %v744, 112
      %v948 = vpop.permute.xlu0 %947
      %949 = vrot.lane.b32.xlu0 %v744, 80
      %v950 = vpop.permute.xlu0 %949
      %v951 = vsel %vm754, %v948, 0
      %v953 = vsel %vm754, %v950, 0
      %955 = vmatpush.xpose.msra.mxu0 0.0
      %956 = vmatpush.xpose.msra.mxu0 0.0
      %957 = vmatpush.xpose.msra.mxu0 0.0
      %958 = vmatpush.xpose.msra.mxu0 0.0
      %959 = vmatpush.xpose.msra.mxu0 0.0
      %960 = vmatpush.xpose.msra.mxu0 0.0
      %961 = vmatpush.xpose.msra.mxu0 0.0
      %962 = vmatpush.xpose.msra.mxu0 0.0
      %963 = vmatpush.xpose.msra.mxu0 0.0
      %964 = vmatpush.xpose.msra.mxu0 0.0
      %965 = vmatpush.xpose.msra.mxu0 0.0
      %966 = vmatpush.xpose.msra.mxu0 0.0
      %967 = vmatpush.xpose.msra.mxu0 0.0
      %968 = vmatpush.xpose.msra.mxu0 0.0
      %969 = vmatpush.xpose.msra.mxu0 0.0
      %970 = vmatpush.xpose.msra.mxu0 %v953
      %971 = vmatmul.f32.gmra.mxu0 %v951
      %v972 = vpop.f32.mrf.mxu0
      %v973 = vadd.f32 0.0, %v972
      %974 = vdwg.mxu0
      %v975 = vmul.f32 %v945, 0.25
      %v976 = vmul.f32 %v973, 0.25
      %v977 = vadd.f32 %v975, %v707
      %v978 = vadd.f32 %v976, %v708
      %v979 = vsel %vm810, %v977, -inf
      %980 = vmax.xlane.f32.xlu0 %v979
      %v981 = vpop.xlane.xlu0 %980
      %v982 = vsel %vm810, %v978, -inf
      %983 = vmax.xlane.f32.xlu0 %v982
      %v984 = vpop.xlane.xlu0 %983
      %v985 = vsub.f32 %v977, %v981
      %v986 = vsub.f32 %v978, %v984
      %v987 = vmul.f32 %v985, 1.442695
      %v988 = vpow.pop %v987
      %v989 = vmul.f32 %v986, 1.442695
      %v990 = vpow.pop %v989
      %v991 = vsel %vm810, %v988, 0.0
      %992 = vadd.xlane.f32.xlu0 %v991
      %v993 = vpop.xlane.xlu0 %992
      %v994 = vsel %vm810, %v990, 0.0
      %995 = vadd.xlane.f32.xlu0 %v994
      %v996 = vpop.xlane.xlu0 %995
      %v997 = vrcp.pop %v993
      %v998 = vrcp.pop %v996
      %v999 = vmul.f32 %v988, %v997
      %v1000 = vmul.f32 %v990, %v998
      %1001 = vrot.lane.b32.xlu0 %v741, 48
      %v1002 = vpop.permute.xlu0 %1001
      %v1005 = vsel %vm810, %v999, 0
      %1007 = vmatpush.msra.mxu0 0.0
      %1008 = vmatpush.msra.mxu0 0.0
      %1009 = vmatpush.msra.mxu0 0.0
      %1010 = vmatpush.msra.mxu0 0.0
      %1011 = vmatpush.msra.mxu0 0.0
      %1012 = vmatpush.msra.mxu0 0.0
      %1013 = vmatpush.msra.mxu0 0.0
      %1014 = vmatpush.msra.mxu0 0.0
      %1015 = vmatpush.msra.mxu0 0.0
      %1016 = vmatpush.msra.mxu0 0.0
      %1017 = vmatpush.msra.mxu0 0.0
      %1018 = vmatpush.msra.mxu0 0.0
      %1019 = vmatpush.msra.mxu0 0.0
      %1020 = vmatpush.msra.mxu0 0.0
      %1021 = vmatpush.msra.mxu0 0.0
      %1022 = vmatpush.msra.mxu0 %v1002
      %1023 = vmatmul.f32.gmra.mxu0 %v1005
      %v1024 = vpop.f32.mrf.mxu0
      %v1025 = vadd.f32 0.0, %v1024
      %1026 = vdwg.mxu0
      %1027 = vrot.lane.b32.xlu0 %v744, 48
      %v1028 = vpop.permute.xlu0 %1027
      %v1031 = vsel %vm810, %v1000, 0
      %1033 = vmatpush.msra.mxu0 0.0
      %1034 = vmatpush.msra.mxu0 0.0
      %1035 = vmatpush.msra.mxu0 0.0
      %1036 = vmatpush.msra.mxu0 0.0
      %1037 = vmatpush.msra.mxu0 0.0
      %1038 = vmatpush.msra.mxu0 0.0
      %1039 = vmatpush.msra.mxu0 0.0
      %1040 = vmatpush.msra.mxu0 0.0
      %1041 = vmatpush.msra.mxu0 0.0
      %1042 = vmatpush.msra.mxu0 0.0
      %1043 = vmatpush.msra.mxu0 0.0
      %1044 = vmatpush.msra.mxu0 0.0
      %1045 = vmatpush.msra.mxu0 0.0
      %1046 = vmatpush.msra.mxu0 0.0
      %1047 = vmatpush.msra.mxu0 0.0
      %1048 = vmatpush.msra.mxu0 %v1028
      %1049 = vmatmul.f32.gmra.mxu0 %v1031
      %v1050 = vpop.f32.mrf.mxu0
      %v1051 = vadd.f32 0.0, %v1050
      %1052 = vdwg.mxu0
      %v1054 = vsel %vm754, %v1025, 0
      %v1057 = vsel %vm754, %v1051, 0
      %1059 = vmatpush.msra.mxu0 0.0
      %1060 = vmatpush.msra.mxu0 0.0
      %1061 = vmatpush.msra.mxu0 0.0
      %1062 = vmatpush.msra.mxu0 0.0
      %1063 = vmatpush.msra.mxu0 0.0
      %1064 = vmatpush.msra.mxu0 0.0
      %1065 = vmatpush.msra.mxu0 0.0
      %1066 = vmatpush.msra.mxu0 0.0
      %1067 = vmatpush.msra.mxu0 0.0
      %1068 = vmatpush.msra.mxu0 0.0
      %1069 = vmatpush.msra.mxu0 0.0
      %1070 = vmatpush.msra.mxu0 0.0
      %1071 = vmatpush.msra.mxu0 0.0
      %1072 = vmatpush.msra.mxu0 0.0
      %1073 = vmatpush.msra.mxu0 %v749
      %1074 = vmatpush.msra.mxu0 %v748
      %1075 = vmatmul.f32.gmra.mxu0 %v1054
      %v1076 = vpop.f32.mrf.mxu0
      %v1077 = vadd.f32 0.0, %v1076
      %1078 = vmatmul.f32.gmra.mxu0 %v1057
      %v1079 = vpop.f32.mrf.mxu0
      %v1080 = vadd.f32 0.0, %v1079
      %1081 = vdwg.mxu0
      %v1082 = vadd.f32 %v917, %v1077
      %v1083 = vadd.f32 %v918, %v1080
      %v1084 = vadd.f32 %v691, %v1082
      %v1085 = vadd.f32 %v692, %v1083
      %v1086 = vld [vmem:[%s8] sm:$0x1]
      %v1087 = vld [vmem:[%s9] sm:$0x1]
      %v1088 = vsel %vm631, %v1084, 0.0
      %1089 = vadd.xlane.f32.xlu0 %v1088
      %v1090 = vpop.xlane.xlu0 %1089
      %v1091 = vsel %vm631, %v1085, 0.0
      %1092 = vadd.xlane.f32.xlu0 %v1091
      %v1093 = vpop.xlane.xlu0 %1092
      %v1094 = vmul.f32 %v1090, %v644
      %v1095 = vmul.f32 %v1093, %v644
      %v1096 = vsub.f32 %v1084, %v1094
      %v1097 = vsub.f32 %v1085, %v1095
      %v1098 = vmul.f32 %v1096, %v1096
      %v1099 = vmul.f32 %v1097, %v1097
      %v1100 = vsel %vm631, %v1098, 0.0
      %1101 = vadd.xlane.f32.xlu0 %v1100
      %v1102 = vpop.xlane.xlu0 %1101
      %v1103 = vsel %vm631, %v1099, 0.0
      %1104 = vadd.xlane.f32.xlu0 %v1103
      %v1105 = vpop.xlane.xlu0 %1104
      %v1106 = vmul.f32 %v1102, %v644
      %v1107 = vmul.f32 %v1105, %v644
      %v1108 = vadd.f32 %v1106, 1e-12
      %v1109 = vadd.f32 %v1107, 1e-12
      %v1110 = vrsqrt.pop %v1108
      %v1111 = vmul.f32 %v1110, %v1108
      %v1112 = vmul.f32 %v1111, %v1110
      %v1113 = vmul.f32 0.5, %v1112
      %v1114 = vsub.f32 1.5, %v1113
      %v1115 = vmul.f32 %v1110, %v1114
      %vm1116 = vweird.f32 %v1108
      %vm1117 = vweird.f32 %v1110
      %vm1118 = vmor %vm1116, %vm1117
      %v1119 = vsel %vm1118, %v1110, %v1115
      %v1120 = vrsqrt.pop %v1109
      %v1121 = vmul.f32 %v1120, %v1109
      %v1122 = vmul.f32 %v1121, %v1120
      %v1123 = vmul.f32 0.5, %v1122
      %v1124 = vsub.f32 1.5, %v1123
      %v1125 = vmul.f32 %v1120, %v1124
      %vm1126 = vweird.f32 %v1109
      %vm1127 = vweird.f32 %v1120
      %vm1128 = vmor %vm1126, %vm1127
      %v1129 = vsel %vm1128, %v1120, %v1125
      %v1130 = vmul.f32 %v1096, %v1119
      %v1131 = vmul.f32 %v1097, %v1129
      %v1133 = vperm.slane %v1086, 0
      %v1135 = vmul.f32 %v1130, %v1133
      %v1136 = vmul.f32 %v1131, %v1133
      %v1138 = vperm.slane %v1087, 0
      %v1140 = vadd.f32 %v1135, %v1138
      %v1141 = vadd.f32 %v1136, %v1138
      %v1142 = vld [vmem:[%s10] sm:$0xff]
      %v1143 = vld [vmem:[%s10 + $0x8] sm:$0xff]
      %v1144 = vld [vmem:[%s10 + $0x10] sm:$0xff]
      %v1145 = vld [vmem:[%s10 + $0x18] sm:$0xff]
      %v1146 = vld [vmem:[%s11] sm:$0x1]
      %v1148 = vperm.slane %v1146, 0
      %v1151 = vsel %vm631, %v1140, 0
      %v1154 = vsel %vm631, %v1141, 0
      %1156 = vmatpush.msra.mxu0 0.0
      %1157 = vmatpush.msra.mxu0 0.0
      %1158 = vmatpush.msra.mxu0 0.0
      %1159 = vmatpush.msra.mxu0 0.0
      %1160 = vmatpush.msra.mxu0 0.0
      %1161 = vmatpush.msra.mxu0 0.0
      %1162 = vmatpush.msra.mxu0 0.0
      %1163 = vmatpush.msra.mxu0 0.0
      %1164 = vmatpush.msra.mxu0 0.0
      %1165 = vmatpush.msra.mxu0 0.0
      %1166 = vmatpush.msra.mxu0 0.0
      %1167 = vmatpush.msra.mxu0 0.0
      %1168 = vmatpush.msra.mxu0 %v1145
      %1169 = vmatpush.msra.mxu0 %v1144
      %1170 = vmatpush.msra.mxu0 %v1143
      %1171 = vmatpush.msra.mxu0 %v1142
      %1172 = vmatmul.f32.gmra.mxu0 %v1151
      %v1173 = vpop.f32.mrf.mxu0
      %v1174 = vadd.f32 %v1148, %v1173
      %1175 = vmatmul.f32.gmra.mxu0 %v1154
      %v1176 = vpop.f32.mrf.mxu0
      %v1177 = vadd.f32 %v1148, %v1176
      %1178 = vdwg.mxu0
      %v1179 = vmul.f32 %v1174, 0.5
      %v1180 = vmul.f32 %v1177, 0.5
      %v1181 = vmul.f32 %v1174, 0.044715
      %v1182 = vmul.f32 %v1177, 0.044715
      %v1183 = vmul.f32 %v1181, %v1174
      %v1184 = vmul.f32 %v1182, %v1177
      %v1185 = vmul.f32 %v1183, %v1174
      %v1186 = vmul.f32 %v1184, %v1177
      %v1187 = vadd.f32 %v1174, %v1185
      %v1188 = vadd.f32 %v1177, %v1186
      %v1189 = vmul.f32 %v1187, 0.7978846
      %v1190 = vmul.f32 %v1188, 0.7978846
      %v1191 = vtanh.pop %v1189
      %v1192 = vtanh.pop %v1190
      %v1193 = vadd.f32 %v1191, 1.0
      %v1194 = vadd.f32 %v1192, 1.0
      %v1195 = vmul.f32 %v1179, %v1193
      %v1196 = vmul.f32 %v1180, %v1194
      %v1197 = vld [vmem:[%s12] sm:$0xff]
      %v1198 = vld [vmem:[%s12 + $0x8] sm:$0xff]
      %v1199 = vld [vmem:[%s12 + $0x10] sm:$0xff]
      %v1200 = vld [vmem:[%s12 + $0x18] sm:$0xff]
      %v1201 = vld [vmem:[%s12 + $0x20] sm:$0xff]
      %v1202 = vld [vmem:[%s12 + $0x28] sm:$0xff]
      %v1203 = vld [vmem:[%s12 + $0x30] sm:$0xff]
      %v1204 = vld [vmem:[%s12 + $0x38] sm:$0xff]
      %v1205 = vld [vmem:[%s13] sm:$0x1]
      %v1207 = vperm.slane %v1205, 0
      %vm1209 = vcmask 523264
      %v1211 = vsel %vm1209, %v1195, 0
      %v1214 = vsel %vm1209, %v1196, 0
      %1216 = vmatpush.msra.mxu0 0.0
      %1217 = vmatpush.msra.mxu0 0.0
      %1218 = vmatpush.msra.mxu0 0.0
      %1219 = vmatpush.msra.mxu0 0.0
      %1220 = vmatpush.msra.mxu0 0.0
      %1221 = vmatpush.msra.mxu0 0.0
      %1222 = vmatpush.msra.mxu0 0.0
      %1223 = vmatpush.msra.mxu0 0.0
      %1224 = vmatpush.msra.mxu0 %v1204
      %1225 = vmatpush.msra.mxu0 %v1203
      %1226 = vmatpush.msra.mxu0 %v1202
      %1227 = vmatpush.msra.mxu0 %v1201
      %1228 = vmatpush.msra.mxu0 %v1200
      %1229 = vmatpush.msra.mxu0 %v1199
      %1230 = vmatpush.msra.mxu0 %v1198
      %1231 = vmatpush.msra.mxu0 %v1197
      %1232 = vmatmul.f32.gmra.mxu0 %v1211
      %v1233 = vpop.f32.mrf.mxu0
      %v1234 = vadd.f32 %v1207, %v1233
      %1235 = vmatmul.f32.gmra.mxu0 %v1214
      %v1236 = vpop.f32.mrf.mxu0
      %v1237 = vadd.f32 %v1207, %v1236
      %1238 = vdwg.mxu0
      %v1239 = vadd.f32 %v1140, %v1234
      %v1240 = vadd.f32 %v1141, %v1237
      %v1241 = vld [vmem:[%s14] sm:$0x1]
      %v1242 = vld [vmem:[%s15] sm:$0x1]
      %v1243 = vsel %vm631, %v1239, 0.0
      %1244 = vadd.xlane.f32.xlu0 %v1243
      %v1245 = vpop.xlane.xlu0 %1244
      %v1246 = vsel %vm631, %v1240, 0.0
      %1247 = vadd.xlane.f32.xlu0 %v1246
      %v1248 = vpop.xlane.xlu0 %1247
      %v1249 = vmul.f32 %v1245, %v644
      %v1250 = vmul.f32 %v1248, %v644
      %v1251 = vsub.f32 %v1239, %v1249
      %v1252 = vsub.f32 %v1240, %v1250
      %v1253 = vmul.f32 %v1251, %v1251
      %v1254 = vmul.f32 %v1252, %v1252
      %v1255 = vsel %vm631, %v1253, 0.0
      %1256 = vadd.xlane.f32.xlu0 %v1255
      %v1257 = vpop.xlane.xlu0 %1256
      %v1258 = vsel %vm631, %v1254, 0.0
      %1259 = vadd.xlane.f32.xlu0 %v1258
      %v1260 = vpop.xlane.xlu0 %1259
      %v1261 = vmul.f32 %v1257, %v644
      %v1262 = vmul.f32 %v1260, %v644
      %v1263 = vadd.f32 %v1261, 1e-12
      %v1264 = vadd.f32 %v1262, 1e-12
      %v1265 = vrsqrt.pop %v1263
      %v1266 = vmul.f32 %v1265, %v1263
      %v1267 = vmul.f32 %v1266, %v1265
      %v1268 = vmul.f32 0.5, %v1267
      %v1269 = vsub.f32 1.5, %v1268
      %v1270 = vmul.f32 %v1265, %v1269
      %vm1271 = vweird.f32 %v1263
      %vm1272 = vweird.f32 %v1265
      %vm1273 = vmor %vm1271, %vm1272
      %v1274 = vsel %vm1273, %v1265, %v1270
      %v1275 = vrsqrt.pop %v1264
      %v1276 = vmul.f32 %v1275, %v1264
      %v1277 = vmul.f32 %v1276, %v1275
      %v1278 = vmul.f32 0.5, %v1277
      %v1279 = vsub.f32 1.5, %v1278
      %v1280 = vmul.f32 %v1275, %v1279
      %vm1281 = vweird.f32 %v1264
      %vm1282 = vweird.f32 %v1275
      %vm1283 = vmor %vm1281, %vm1282
      %v1284 = vsel %vm1283, %v1275, %v1280
      %v1285 = vmul.f32 %v1251, %v1274
      %v1286 = vmul.f32 %v1252, %v1284
      %v1288 = vperm.slane %v1241, 0
      %v1290 = vmul.f32 %v1285, %v1288
      %v1291 = vmul.f32 %v1286, %v1288
      %v1293 = vperm.slane %v1242, 0
      %v1295 = vadd.f32 %v1290, %v1293
      %v1296 = vadd.f32 %v1291, %v1293
      %s1297 = scalar_lea.vmem %s4, 32
      %v1298 = vld [vmem:[%s1297] sm:$0xff]
      %v1299 = vld [vmem:[%s1297 + $0x8] sm:$0xff]
      %v1300 = vld [vmem:[%s1297 + $0x10] sm:$0xff]
      %v1301 = vld [vmem:[%s1297 + $0x18] sm:$0xff]
      %s1302 = scalar_lea.vmem %s5, 1
      %v1303 = vld [vmem:[%s1302] sm:$0x1]
      %v1305 = vperm.slane %v1303, 0
      %v1308 = vsel %vm631, %v1295, 0
      %v1311 = vsel %vm631, %v1296, 0
      %1313 = vmatpush.msra.mxu0 0.0
      %1314 = vmatpush.msra.mxu0 0.0
      %1315 = vmatpush.msra.mxu0 0.0
      %1316 = vmatpush.msra.mxu0 0.0
      %1317 = vmatpush.msra.mxu0 0.0
      %1318 = vmatpush.msra.mxu0 0.0
      %1319 = vmatpush.msra.mxu0 0.0
      %1320 = vmatpush.msra.mxu0 0.0
      %1321 = vmatpush.msra.mxu0 0.0
      %1322 = vmatpush.msra.mxu0 0.0
      %1323 = vmatpush.msra.mxu0 0.0
      %1324 = vmatpush.msra.mxu0 0.0
      %1325 = vmatpush.msra.mxu0 %v1301
      %1326 = vmatpush.msra.mxu0 %v1300
      %1327 = vmatpush.msra.mxu0 %v1299
      %1328 = vmatpush.msra.mxu0 %v1298
      %1329 = vmatmul.f32.gmra.mxu0 %v1308
      %v1330 = vpop.f32.mrf.mxu0
      %v1331 = vadd.f32 %v1305, %v1330
      %1332 = vmatmul.f32.gmra.mxu0 %v1311
      %v1333 = vpop.f32.mrf.mxu0
      %v1334 = vadd.f32 %v1305, %v1333
      %1335 = vdwg.mxu0
      %s1336 = scalar_lea.vmem %s6, 32
      %v1337 = vld [vmem:[%s1336] sm:$0xff]
      %v1338 = vld [vmem:[%s1336 + $0x8] sm:$0xff]
      %v1339 = vld [vmem:[%s1336 + $0x10] sm:$0xff]
      %v1340 = vld [vmem:[%s1336 + $0x18] sm:$0xff]
      %s1341 = scalar_lea.vmem %s7, 1
      %v1342 = vld [vmem:[%s1341] sm:$0x1]
      %1344 = vrot.lane.b32.xlu0 %v1331, 96
      %v1345 = vpop.permute.xlu0 %1344
      %v1346 = vsel %vm754, %v1331, 0
      %v1348 = vsel %vm754, %v1345, 0
      %1350 = vmatpush.xpose.msra.mxu0 0.0
      %1351 = vmatpush.xpose.msra.mxu0 0.0
      %1352 = vmatpush.xpose.msra.mxu0 0.0
      %1353 = vmatpush.xpose.msra.mxu0 0.0
      %1354 = vmatpush.xpose.msra.mxu0 0.0
      %1355 = vmatpush.xpose.msra.mxu0 0.0
      %1356 = vmatpush.xpose.msra.mxu0 0.0
      %1357 = vmatpush.xpose.msra.mxu0 0.0
      %1358 = vmatpush.xpose.msra.mxu0 0.0
      %1359 = vmatpush.xpose.msra.mxu0 0.0
      %1360 = vmatpush.xpose.msra.mxu0 0.0
      %1361 = vmatpush.xpose.msra.mxu0 0.0
      %1362 = vmatpush.xpose.msra.mxu0 0.0
      %1363 = vmatpush.xpose.msra.mxu0 0.0
      %1364 = vmatpush.xpose.msra.mxu0 0.0
      %1365 = vmatpush.xpose.msra.mxu0 %v1348
      %1366 = vmatmul.f32.gmra.mxu0 %v1346
      %v1367 = vpop.f32.mrf.mxu0
      %v1368 = vadd.f32 0.0, %v1367
      %1369 = vdwg.mxu0
      %1371 = vrot.lane.b32.xlu0 %v1334, 96
      %v1372 = vpop.permute.xlu0 %1371
      %v1373 = vsel %vm754, %v1334, 0
      %v1375 = vsel %vm754, %v1372, 0
      %1377 = vmatpush.xpose.msra.mxu0 0.0
      %1378 = vmatpush.xpose.msra.mxu0 0.0
      %1379 = vmatpush.xpose.msra.mxu0 0.0
      %1380 = vmatpush.xpose.msra.mxu0 0.0
      %1381 = vmatpush.xpose.msra.mxu0 0.0
      %1382 = vmatpush.xpose.msra.mxu0 0.0
      %1383 = vmatpush.xpose.msra.mxu0 0.0
      %1384 = vmatpush.xpose.msra.mxu0 0.0
      %1385 = vmatpush.xpose.msra.mxu0 0.0
      %1386 = vmatpush.xpose.msra.mxu0 0.0
      %1387 = vmatpush.xpose.msra.mxu0 0.0
      %1388 = vmatpush.xpose.msra.mxu0 0.0
      %1389 = vmatpush.xpose.msra.mxu0 0.0
      %1390 = vmatpush.xpose.msra.mxu0 0.0
      %1391 = vmatpush.xpose.msra.mxu0 0.0
      %1392 = vmatpush.xpose.msra.mxu0 %v1375
      %1393 = vmatmul.f32.gmra.mxu0 %v1373
      %v1394 = vpop.f32.mrf.mxu0
      %v1395 = vadd.f32 0.0, %v1394
      %1396 = vdwg.mxu0
      %v1397 = vmul.f32 %v1368, 0.25
      %v1398 = vmul.f32 %v1395, 0.25
      %v1399 = vadd.f32 %v1397, %v707
      %v1400 = vadd.f32 %v1398, %v708
      %v1401 = vsel %vm810, %v1399, -inf
      %1402 = vmax.xlane.f32.xlu0 %v1401
      %v1403 = vpop.xlane.xlu0 %1402
      %v1404 = vsel %vm810, %v1400, -inf
      %1405 = vmax.xlane.f32.xlu0 %v1404
      %v1406 = vpop.xlane.xlu0 %1405
      %v1407 = vsub.f32 %v1399, %v1403
      %v1408 = vsub.f32 %v1400, %v1406
      %v1409 = vmul.f32 %v1407, 1.442695
      %v1410 = vpow.pop %v1409
      %v1411 = vmul.f32 %v1408, 1.442695
      %v1412 = vpow.pop %v1411
      %v1413 = vsel %vm810, %v1410, 0.0
      %1414 = vadd.xlane.f32.xlu0 %v1413
      %v1415 = vpop.xlane.xlu0 %1414
      %v1416 = vsel %vm810, %v1412, 0.0
      %1417 = vadd.xlane.f32.xlu0 %v1416
      %v1418 = vpop.xlane.xlu0 %1417
      %v1419 = vrcp.pop %v1415
      %v1420 = vrcp.pop %v1418
      %v1421 = vmul.f32 %v1410, %v1419
      %v1422 = vmul.f32 %v1412, %v1420
      %1423 = vrot.lane.b32.xlu0 %v1331, 64
      %v1424 = vpop.permute.xlu0 %1423
      %v1427 = vsel %vm810, %v1421, 0
      %1429 = vmatpush.msra.mxu0 0.0
      %1430 = vmatpush.msra.mxu0 0.0
      %1431 = vmatpush.msra.mxu0 0.0
      %1432 = vmatpush.msra.mxu0 0.0
      %1433 = vmatpush.msra.mxu0 0.0
      %1434 = vmatpush.msra.mxu0 0.0
      %1435 = vmatpush.msra.mxu0 0.0
      %1436 = vmatpush.msra.mxu0 0.0
      %1437 = vmatpush.msra.mxu0 0.0
      %1438 = vmatpush.msra.mxu0 0.0
      %1439 = vmatpush.msra.mxu0 0.0
      %1440 = vmatpush.msra.mxu0 0.0
      %1441 = vmatpush.msra.mxu0 0.0
      %1442 = vmatpush.msra.mxu0 0.0
      %1443 = vmatpush.msra.mxu0 0.0
      %1444 = vmatpush.msra.mxu0 %v1424
      %1445 = vmatmul.f32.gmra.mxu0 %v1427
      %v1446 = vpop.f32.mrf.mxu0
      %v1447 = vadd.f32 0.0, %v1446
      %1448 = vdwg.mxu0
      %1449 = vrot.lane.b32.xlu0 %v1334, 64
      %v1450 = vpop.permute.xlu0 %1449
      %v1453 = vsel %vm810, %v1422, 0
      %1455 = vmatpush.msra.mxu0 0.0
      %1456 = vmatpush.msra.mxu0 0.0
      %1457 = vmatpush.msra.mxu0 0.0
      %1458 = vmatpush.msra.mxu0 0.0
      %1459 = vmatpush.msra.mxu0 0.0
      %1460 = vmatpush.msra.mxu0 0.0
      %1461 = vmatpush.msra.mxu0 0.0
      %1462 = vmatpush.msra.mxu0 0.0
      %1463 = vmatpush.msra.mxu0 0.0
      %1464 = vmatpush.msra.mxu0 0.0
      %1465 = vmatpush.msra.mxu0 0.0
      %1466 = vmatpush.msra.mxu0 0.0
      %1467 = vmatpush.msra.mxu0 0.0
      %1468 = vmatpush.msra.mxu0 0.0
      %1469 = vmatpush.msra.mxu0 0.0
      %1470 = vmatpush.msra.mxu0 %v1450
      %1471 = vmatmul.f32.gmra.mxu0 %v1453
      %v1472 = vpop.f32.mrf.mxu0
      %v1473 = vadd.f32 0.0, %v1472
      %1474 = vdwg.mxu0
      %v1476 = vsel %vm754, %v1447, 0
      %v1479 = vsel %vm754, %v1473, 0
      %1481 = vmatpush.msra.mxu0 0.0
      %1482 = vmatpush.msra.mxu0 0.0
      %1483 = vmatpush.msra.mxu0 0.0
      %1484 = vmatpush.msra.mxu0 0.0
      %1485 = vmatpush.msra.mxu0 0.0
      %1486 = vmatpush.msra.mxu0 0.0
      %1487 = vmatpush.msra.mxu0 0.0
      %1488 = vmatpush.msra.mxu0 0.0
      %1489 = vmatpush.msra.mxu0 0.0
      %1490 = vmatpush.msra.mxu0 0.0
      %1491 = vmatpush.msra.mxu0 0.0
      %1492 = vmatpush.msra.mxu0 0.0
      %1493 = vmatpush.msra.mxu0 0.0
      %1494 = vmatpush.msra.mxu0 0.0
      %1495 = vmatpush.msra.mxu0 %v1338
      %1496 = vmatpush.msra.mxu0 %v1337
      %1497 = vmatmul.f32.gmra.mxu0 %v1476
      %v1498 = vpop.f32.mrf.mxu0
      %v1499 = vadd.f32 0.0, %v1498
      %1500 = vmatmul.f32.gmra.mxu0 %v1479
      %v1501 = vpop.f32.mrf.mxu0
      %v1502 = vadd.f32 0.0, %v1501
      %1503 = vdwg.mxu0
      %v1505 = vperm.slane %v1342, 0
      %v1507 = vadd.f32 %v1505, %v1499
      %v1508 = vadd.f32 %v1505, %v1502
      %1509 = vrot.lane.b32.xlu0 %v1331, 112
      %v1510 = vpop.permute.xlu0 %1509
      %1511 = vrot.lane.b32.xlu0 %v1331, 80
      %v1512 = vpop.permute.xlu0 %1511
      %v1513 = vsel %vm754, %v1510, 0
      %v1515 = vsel %vm754, %v1512, 0
      %1517 = vmatpush.xpose.msra.mxu0 0.0
      %1518 = vmatpush.xpose.msra.mxu0 0.0
      %1519 = vmatpush.xpose.msra.mxu0 0.0
      %1520 = vmatpush.xpose.msra.mxu0 0.0
      %1521 = vmatpush.xpose.msra.mxu0 0.0
      %1522 = vmatpush.xpose.msra.mxu0 0.0
      %1523 = vmatpush.xpose.msra.mxu0 0.0
      %1524 = vmatpush.xpose.msra.mxu0 0.0
      %1525 = vmatpush.xpose.msra.mxu0 0.0
      %1526 = vmatpush.xpose.msra.mxu0 0.0
      %1527 = vmatpush.xpose.msra.mxu0 0.0
      %1528 = vmatpush.xpose.msra.mxu0 0.0
      %1529 = vmatpush.xpose.msra.mxu0 0.0
      %1530 = vmatpush.xpose.msra.mxu0 0.0
      %1531 = vmatpush.xpose.msra.mxu0 0.0
      %1532 = vmatpush.xpose.msra.mxu0 %v1515
      %1533 = vmatmul.f32.gmra.mxu0 %v1513
      %v1534 = vpop.f32.mrf.mxu0
      %v1535 = vadd.f32 0.0, %v1534
      %1536 = vdwg.mxu0
      %1537 = vrot.lane.b32.xlu0 %v1334, 112
      %v1538 = vpop.permute.xlu0 %1537
      %1539 = vrot.lane.b32.xlu0 %v1334, 80
      %v1540 = vpop.permute.xlu0 %1539
      %v1541 = vsel %vm754, %v1538, 0
      %v1543 = vsel %vm754, %v1540, 0
      %1545 = vmatpush.xpose.msra.mxu0 0.0
      %1546 = vmatpush.xpose.msra.mxu0 0.0
      %1547 = vmatpush.xpose.msra.mxu0 0.0
      %1548 = vmatpush.xpose.msra.mxu0 0.0
      %1549 = vmatpush.xpose.msra.mxu0 0.0
      %1550 = vmatpush.xpose.msra.mxu0 0.0
      %1551 = vmatpush.xpose.msra.mxu0 0.0
      %1552 = vmatpush.xpose.msra.mxu0 0.0
      %1553 = vmatpush.xpose.msra.mxu0 0.0
      %1554 = vmatpush.xpose.msra.mxu0 0.0
      %1555 = vmatpush.xpose.msra.mxu0 0.0
      %1556 = vmatpush.xpose.msra.mxu0 0.0
      %1557 = vmatpush.xpose.msra.mxu0 0.0
      %1558 = vmatpush.xpose.msra.mxu0 0.0
      %1559 = vmatpush.xpose.msra.mxu0 0.0
      %1560 = vmatpush.xpose.msra.mxu0 %v1543
      %1561 = vmatmul.f32.gmra.mxu0 %v1541
      %v1562 = vpop.f32.mrf.mxu0
      %v1563 = vadd.f32 0.0, %v1562
      %1564 = vdwg.mxu0
      %v1565 = vmul.f32 %v1535, 0.25
      %v1566 = vmul.f32 %v1563, 0.25
      %v1567 = vadd.f32 %v1565, %v707
      %v1568 = vadd.f32 %v1566, %v708
      %v1569 = vsel %vm810, %v1567, -inf
      %1570 = vmax.xlane.f32.xlu0 %v1569
      %v1571 = vpop.xlane.xlu0 %1570
      %v1572 = vsel %vm810, %v1568, -inf
      %1573 = vmax.xlane.f32.xlu0 %v1572
      %v1574 = vpop.xlane.xlu0 %1573
      %v1575 = vsub.f32 %v1567, %v1571
      %v1576 = vsub.f32 %v1568, %v1574
      %v1577 = vmul.f32 %v1575, 1.442695
      %v1578 = vpow.pop %v1577
      %v1579 = vmul.f32 %v1576, 1.442695
      %v1580 = vpow.pop %v1579
      %v1581 = vsel %vm810, %v1578, 0.0
      %1582 = vadd.xlane.f32.xlu0 %v1581
      %v1583 = vpop.xlane.xlu0 %1582
      %v1584 = vsel %vm810, %v1580, 0.0
      %1585 = vadd.xlane.f32.xlu0 %v1584
      %v1586 = vpop.xlane.xlu0 %1585
      %v1587 = vrcp.pop %v1583
      %v1588 = vrcp.pop %v1586
      %v1589 = vmul.f32 %v1578, %v1587
      %v1590 = vmul.f32 %v1580, %v1588
      %1591 = vrot.lane.b32.xlu0 %v1331, 48
      %v1592 = vpop.permute.xlu0 %1591
      %v1595 = vsel %vm810, %v1589, 0
      %1597 = vmatpush.msra.mxu0 0.0
      %1598 = vmatpush.msra.mxu0 0.0
      %1599 = vmatpush.msra.mxu0 0.0
      %1600 = vmatpush.msra.mxu0 0.0
      %1601 = vmatpush.msra.mxu0 0.0
      %1602 = vmatpush.msra.mxu0 0.0
      %1603 = vmatpush.msra.mxu0 0.0
      %1604 = vmatpush.msra.mxu0 0.0
      %1605 = vmatpush.msra.mxu0 0.0
      %1606 = vmatpush.msra.mxu0 0.0
      %1607 = vmatpush.msra.mxu0 0.0
      %1608 = vmatpush.msra.mxu0 0.0
      %1609 = vmatpush.msra.mxu0 0.0
      %1610 = vmatpush.msra.mxu0 0.0
      %1611 = vmatpush.msra.mxu0 0.0
      %1612 = vmatpush.msra.mxu0 %v1592
      %1613 = vmatmul.f32.gmra.mxu0 %v1595
      %v1614 = vpop.f32.mrf.mxu0
      %v1615 = vadd.f32 0.0, %v1614
      %1616 = vdwg.mxu0
      %1617 = vrot.lane.b32.xlu0 %v1334, 48
      %v1618 = vpop.permute.xlu0 %1617
      %v1621 = vsel %vm810, %v1590, 0
      %1623 = vmatpush.msra.mxu0 0.0
      %1624 = vmatpush.msra.mxu0 0.0
      %1625 = vmatpush.msra.mxu0 0.0
      %1626 = vmatpush.msra.mxu0 0.0
      %1627 = vmatpush.msra.mxu0 0.0
      %1628 = vmatpush.msra.mxu0 0.0
      %1629 = vmatpush.msra.mxu0 0.0
      %1630 = vmatpush.msra.mxu0 0.0
      %1631 = vmatpush.msra.mxu0 0.0
      %1632 = vmatpush.msra.mxu0 0.0
      %1633 = vmatpush.msra.mxu0 0.0
      %1634 = vmatpush.msra.mxu0 0.0
      %1635 = vmatpush.msra.mxu0 0.0
      %1636 = vmatpush.msra.mxu0 0.0
      %1637 = vmatpush.msra.mxu0 0.0
      %1638 = vmatpush.msra.mxu0 %v1618
      %1639 = vmatmul.f32.gmra.mxu0 %v1621
      %v1640 = vpop.f32.mrf.mxu0
      %v1641 = vadd.f32 0.0, %v1640
      %1642 = vdwg.mxu0
      %v1644 = vsel %vm754, %v1615, 0
      %v1647 = vsel %vm754, %v1641, 0
      %1649 = vmatpush.msra.mxu0 0.0
      %1650 = vmatpush.msra.mxu0 0.0
      %1651 = vmatpush.msra.mxu0 0.0
      %1652 = vmatpush.msra.mxu0 0.0
      %1653 = vmatpush.msra.mxu0 0.0
      %1654 = vmatpush.msra.mxu0 0.0
      %1655 = vmatpush.msra.mxu0 0.0
      %1656 = vmatpush.msra.mxu0 0.0
      %1657 = vmatpush.msra.mxu0 0.0
      %1658 = vmatpush.msra.mxu0 0.0
      %1659 = vmatpush.msra.mxu0 0.0
      %1660 = vmatpush.msra.mxu0 0.0
      %1661 = vmatpush.msra.mxu0 0.0
      %1662 = vmatpush.msra.mxu0 0.0
      %1663 = vmatpush.msra.mxu0 %v1340
      %1664 = vmatpush.msra.mxu0 %v1339
      %1665 = vmatmul.f32.gmra.mxu0 %v1644
      %v1666 = vpop.f32.mrf.mxu0
      %v1667 = vadd.f32 0.0, %v1666
      %1668 = vmatmul.f32.gmra.mxu0 %v1647
      %v1669 = vpop.f32.mrf.mxu0
      %v1670 = vadd.f32 0.0, %v1669
      %1671 = vdwg.mxu0
      %v1672 = vadd.f32 %v1507, %v1667
      %v1673 = vadd.f32 %v1508, %v1670
      %v1674 = vadd.f32 %v1295, %v1672
      %v1675 = vadd.f32 %v1296, %v1673
      %s1676 = scalar_lea.vmem %s8, 1
      %v1677 = vld [vmem:[%s1676] sm:$0x1]
      %s1678 = scalar_lea.vmem %s9, 1
      %v1679 = vld [vmem:[%s1678] sm:$0x1]
      %v1680 = vsel %vm631, %v1674, 0.0
      %1681 = vadd.xlane.f32.xlu0 %v1680
      %v1682 = vpop.xlane.xlu0 %1681
      %v1683 = vsel %vm631, %v1675, 0.0
      %1684 = vadd.xlane.f32.xlu0 %v1683
      %v1685 = vpop.xlane.xlu0 %1684
      %v1686 = vmul.f32 %v1682, %v644
      %v1687 = vmul.f32 %v1685, %v644
      %v1688 = vsub.f32 %v1674, %v1686
      %v1689 = vsub.f32 %v1675, %v1687
      %v1690 = vmul.f32 %v1688, %v1688
      %v1691 = vmul.f32 %v1689, %v1689
      %v1692 = vsel %vm631, %v1690, 0.0
      %1693 = vadd.xlane.f32.xlu0 %v1692
      %v1694 = vpop.xlane.xlu0 %1693
      %v1695 = vsel %vm631, %v1691, 0.0
      %1696 = vadd.xlane.f32.xlu0 %v1695
      %v1697 = vpop.xlane.xlu0 %1696
      %v1698 = vmul.f32 %v1694, %v644
      %v1699 = vmul.f32 %v1697, %v644
      %v1700 = vadd.f32 %v1698, 1e-12
      %v1701 = vadd.f32 %v1699, 1e-12
      %v1702 = vrsqrt.pop %v1700
      %v1703 = vmul.f32 %v1702, %v1700
      %v1704 = vmul.f32 %v1703, %v1702
      %v1705 = vmul.f32 0.5, %v1704
      %v1706 = vsub.f32 1.5, %v1705
      %v1707 = vmul.f32 %v1702, %v1706
      %vm1708 = vweird.f32 %v1700
      %vm1709 = vweird.f32 %v1702
      %vm1710 = vmor %vm1708, %vm1709
      %v1711 = vsel %vm1710, %v1702, %v1707
      %v1712 = vrsqrt.pop %v1701
      %v1713 = vmul.f32 %v1712, %v1701
      %v1714 = vmul.f32 %v1713, %v1712
      %v1715 = vmul.f32 0.5, %v1714
      %v1716 = vsub.f32 1.5, %v1715
      %v1717 = vmul.f32 %v1712, %v1716
      %vm1718 = vweird.f32 %v1701
      %vm1719 = vweird.f32 %v1712
      %vm1720 = vmor %vm1718, %vm1719
      %v1721 = vsel %vm1720, %v1712, %v1717
      %v1722 = vmul.f32 %v1688, %v1711
      %v1723 = vmul.f32 %v1689, %v1721
      %v1725 = vperm.slane %v1677, 0
      %v1727 = vmul.f32 %v1722, %v1725
      %v1728 = vmul.f32 %v1723, %v1725
      %v1730 = vperm.slane %v1679, 0
      %v1732 = vadd.f32 %v1727, %v1730
      %v1733 = vadd.f32 %v1728, %v1730
      %s1734 = scalar_lea.vmem %s10, 32
      %v1735 = vld [vmem:[%s1734] sm:$0xff]
      %v1736 = vld [vmem:[%s1734 + $0x8] sm:$0xff]
      %v1737 = vld [vmem:[%s1734 + $0x10] sm:$0xff]
      %v1738 = vld [vmem:[%s1734 + $0x18] sm:$0xff]
      %s1739 = scalar_lea.vmem %s11, 1
      %v1740 = vld [vmem:[%s1739] sm:$0x1]
      %v1742 = vperm.slane %v1740, 0
      %v1745 = vsel %vm631, %v1732, 0
      %v1748 = vsel %vm631, %v1733, 0
      %1750 = vmatpush.msra.mxu0 0.0
      %1751 = vmatpush.msra.mxu0 0.0
      %1752 = vmatpush.msra.mxu0 0.0
      %1753 = vmatpush.msra.mxu0 0.0
      %1754 = vmatpush.msra.mxu0 0.0
      %1755 = vmatpush.msra.mxu0 0.0
      %1756 = vmatpush.msra.mxu0 0.0
      %1757 = vmatpush.msra.mxu0 0.0
      %1758 = vmatpush.msra.mxu0 0.0
      %1759 = vmatpush.msra.mxu0 0.0
      %1760 = vmatpush.msra.mxu0 0.0
      %1761 = vmatpush.msra.mxu0 0.0
      %1762 = vmatpush.msra.mxu0 %v1738
      %1763 = vmatpush.msra.mxu0 %v1737
      %1764 = vmatpush.msra.mxu0 %v1736
      %1765 = vmatpush.msra.mxu0 %v1735
      %1766 = vmatmul.f32.gmra.mxu0 %v1745
      %v1767 = vpop.f32.mrf.mxu0
      %v1768 = vadd.f32 %v1742, %v1767
      %1769 = vmatmul.f32.gmra.mxu0 %v1748
      %v1770 = vpop.f32.mrf.mxu0
      %v1771 = vadd.f32 %v1742, %v1770
      %1772 = vdwg.mxu0
      %v1773 = vmul.f32 %v1768, 0.5
      %v1774 = vmul.f32 %v1771, 0.5
      %v1775 = vmul.f32 %v1768, 0.044715
      %v1776 = vmul.f32 %v1771, 0.044715
      %v1777 = vmul.f32 %v1775, %v1768
      %v1778 = vmul.f32 %v1776, %v1771
      %v1779 = vmul.f32 %v1777, %v1768
      %v1780 = vmul.f32 %v1778, %v1771
      %v1781 = vadd.f32 %v1768, %v1779
      %v1782 = vadd.f32 %v1771, %v1780
      %v1783 = vmul.f32 %v1781, 0.7978846
      %v1784 = vmul.f32 %v1782, 0.7978846
      %v1785 = vtanh.pop %v1783
      %v1786 = vtanh.pop %v1784
      %v1787 = vadd.f32 %v1785, 1.0
      %v1788 = vadd.f32 %v1786, 1.0
      %v1789 = vmul.f32 %v1773, %v1787
      %v1790 = vmul.f32 %v1774, %v1788
      %s1791 = scalar_lea.vmem %s12, 64
      %v1792 = vld [vmem:[%s1791] sm:$0xff]
      %v1793 = vld [vmem:[%s1791 + $0x8] sm:$0xff]
      %v1794 = vld [vmem:[%s1791 + $0x10] sm:$0xff]
      %v1795 = vld [vmem:[%s1791 + $0x18] sm:$0xff]
      %v1796 = vld [vmem:[%s1791 + $0x20] sm:$0xff]
      %v1797 = vld [vmem:[%s1791 + $0x28] sm:$0xff]
      %v1798 = vld [vmem:[%s1791 + $0x30] sm:$0xff]
      %v1799 = vld [vmem:[%s1791 + $0x38] sm:$0xff]
      %s1800 = scalar_lea.vmem %s13, 1
      %v1801 = vld [vmem:[%s1800] sm:$0x1]
      %v1803 = vperm.slane %v1801, 0
      %v1806 = vsel %vm1209, %v1789, 0
      %v1809 = vsel %vm1209, %v1790, 0
      %1811 = vmatpush.msra.mxu0 0.0
      %1812 = vmatpush.msra.mxu0 0.0
      %1813 = vmatpush.msra.mxu0 0.0
      %1814 = vmatpush.msra.mxu0 0.0
      %1815 = vmatpush.msra.mxu0 0.0
      %1816 = vmatpush.msra.mxu0 0.0
      %1817 = vmatpush.msra.mxu0 0.0
      %1818 = vmatpush.msra.mxu0 0.0
      %1819 = vmatpush.msra.mxu0 %v1799
      %1820 = vmatpush.msra.mxu0 %v1798
      %1821 = vmatpush.msra.mxu0 %v1797
      %1822 = vmatpush.msra.mxu0 %v1796
      %1823 = vmatpush.msra.mxu0 %v1795
      %1824 = vmatpush.msra.mxu0 %v1794
      %1825 = vmatpush.msra.mxu0 %v1793
      %1826 = vmatpush.msra.mxu0 %v1792
      %1827 = vmatmul.f32.gmra.mxu0 %v1806
      %v1828 = vpop.f32.mrf.mxu0
      %v1829 = vadd.f32 %v1803, %v1828
      %1830 = vmatmul.f32.gmra.mxu0 %v1809
      %v1831 = vpop.f32.mrf.mxu0
      %v1832 = vadd.f32 %v1803, %v1831
      %1833 = vdwg.mxu0
      %v1834 = vadd.f32 %v1732, %v1829
      %v1835 = vadd.f32 %v1733, %v1832
      %s1836 = scalar_lea.vmem %s14, 1
      %v1837 = vld [vmem:[%s1836] sm:$0x1]
      %s1838 = scalar_lea.vmem %s15, 1
      %v1839 = vld [vmem:[%s1838] sm:$0x1]
      %v1840 = vsel %vm631, %v1834, 0.0
      %1841 = vadd.xlane.f32.xlu0 %v1840
      %v1842 = vpop.xlane.xlu0 %1841
      %v1843 = vsel %vm631, %v1835, 0.0
      %1844 = vadd.xlane.f32.xlu0 %v1843
      %v1845 = vpop.xlane.xlu0 %1844
      %v1846 = vmul.f32 %v1842, %v644
      %v1847 = vmul.f32 %v1845, %v644
      %v1848 = vsub.f32 %v1834, %v1846
      %v1849 = vsub.f32 %v1835, %v1847
      %v1850 = vmul.f32 %v1848, %v1848
      %v1851 = vmul.f32 %v1849, %v1849
      %v1852 = vsel %vm631, %v1850, 0.0
      %1853 = vadd.xlane.f32.xlu0 %v1852
      %v1854 = vpop.xlane.xlu0 %1853
      %v1855 = vsel %vm631, %v1851, 0.0
      %1856 = vadd.xlane.f32.xlu0 %v1855
      %v1857 = vpop.xlane.xlu0 %1856
      %v1858 = vmul.f32 %v1854, %v644
      %v1859 = vmul.f32 %v1857, %v644
      %v1860 = vadd.f32 %v1858, 1e-12
      %v1861 = vadd.f32 %v1859, 1e-12
      %v1862 = vrsqrt.pop %v1860
      %v1863 = vmul.f32 %v1862, %v1860
      %v1864 = vmul.f32 %v1863, %v1862
      %v1865 = vmul.f32 0.5, %v1864
      %v1866 = vsub.f32 1.5, %v1865
      %v1867 = vmul.f32 %v1862, %v1866
      %vm1868 = vweird.f32 %v1860
      %vm1869 = vweird.f32 %v1862
      %vm1870 = vmor %vm1868, %vm1869
      %v1871 = vsel %vm1870, %v1862, %v1867
      %v1872 = vrsqrt.pop %v1861
      %v1873 = vmul.f32 %v1872, %v1861
      %v1874 = vmul.f32 %v1873, %v1872
      %v1875 = vmul.f32 0.5, %v1874
      %v1876 = vsub.f32 1.5, %v1875
      %v1877 = vmul.f32 %v1872, %v1876
      %vm1878 = vweird.f32 %v1861
      %vm1879 = vweird.f32 %v1872
      %vm1880 = vmor %vm1878, %vm1879
      %v1881 = vsel %vm1880, %v1872, %v1877
      %v1882 = vmul.f32 %v1848, %v1871
      %v1883 = vmul.f32 %v1849, %v1881
      %v1885 = vperm.slane %v1837, 0
      %v1887 = vmul.f32 %v1882, %v1885
      %v1888 = vmul.f32 %v1883, %v1885
      %v1890 = vperm.slane %v1839, 0
      %v1892 = vadd.f32 %v1887, %v1890
      %v1893 = vadd.f32 %v1888, %v1890
      %v1894 = vsub.f32 %v1892, %v1893
      %v1895 = vand.u32 2147483647, %v1894
      %v1896 = vld [vmem:[%s16] sm:$0xff]
      %v1897 = vld [vmem:[%s16 + $0x8] sm:$0xff]
      %v1898 = vld [vmem:[%s16 + $0x10] sm:$0xff]
      %v1899 = vld [vmem:[%s16 + $0x18] sm:$0xff]
      %v1900 = vld [vmem:[%s16 + $0x20] sm:$0xff]
      %v1901 = vld [vmem:[%s16 + $0x28] sm:$0xff]
      %v1902 = vld [vmem:[%s16 + $0x30] sm:$0xff]
      %v1903 = vld [vmem:[%s16 + $0x38] sm:$0xff]
      %v1904 = vld [vmem:[%s16 + $0x40] sm:$0xff]
      %v1905 = vld [vmem:[%s16 + $0x48] sm:$0xff]
      %v1906 = vld [vmem:[%s16 + $0x50] sm:$0xff]
      %v1907 = vld [vmem:[%s16 + $0x58] sm:$0xff]
      %v1909 = vsel %vm631, %v1893, 0
      %1911 = vmatpush.msra.mxu0 0.0
      %1912 = vmatpush.msra.mxu0 0.0
      %1913 = vmatpush.msra.mxu0 0.0
      %1914 = vmatpush.msra.mxu0 0.0
      %1915 = vmatpush.msra.mxu0 0.0
      %1916 = vmatpush.msra.mxu0 0.0
      %1917 = vmatpush.msra.mxu0 0.0
      %1918 = vmatpush.msra.mxu0 0.0
      %1919 = vmatpush.msra.mxu0 0.0
      %1920 = vmatpush.msra.mxu0 0.0
      %1921 = vmatpush.msra.mxu0 0.0
      %1922 = vmatpush.msra.mxu0 0.0
      %1923 = vmatpush.msra.mxu0 %v1903
      %1924 = vmatpush.msra.mxu0 %v1902
      %1925 = vmatpush.msra.mxu0 %v1901
      %1926 = vmatpush.msra.mxu0 %v1900
      %1927 = vmatmul.f32.gmra.mxu0 %v1909
      %v1928 = vpop.f32.mrf.mxu0
      %v1929 = vadd.f32 0.0, %v1928
      %1930 = vdwg.mxu0
      %v1932 = vsel %vm631, %v1892, 0
      %1934 = vmatpush.msra.mxu0 0.0
      %1935 = vmatpush.msra.mxu0 0.0
      %1936 = vmatpush.msra.mxu0 0.0
      %1937 = vmatpush.msra.mxu0 0.0
      %1938 = vmatpush.msra.mxu0 0.0
      %1939 = vmatpush.msra.mxu0 0.0
      %1940 = vmatpush.msra.mxu0 0.0
      %1941 = vmatpush.msra.mxu0 0.0
      %1942 = vmatpush.msra.mxu0 0.0
      %1943 = vmatpush.msra.mxu0 0.0
      %1944 = vmatpush.msra.mxu0 0.0
      %1945 = vmatpush.msra.mxu0 0.0
      %1946 = vmatpush.msra.mxu0 %v1899
      %1947 = vmatpush.msra.mxu0 %v1898
      %1948 = vmatpush.msra.mxu0 %v1897
      %1949 = vmatpush.msra.mxu0 %v1896
      %1950 = vmatmul.f32.gmra.mxu0 %v1932
      %v1951 = vpop.f32.mrf.mxu0
      %v1952 = vadd.f32 %v1929, %v1951
      %1953 = vdwg.mxu0
      %v1955 = vsel %vm631, %v1895, 0
      %1957 = vmatpush.msra.mxu0 0.0
      %1958 = vmatpush.msra.mxu0 0.0
      %1959 = vmatpush.msra.mxu0 0.0
      %1960 = vmatpush.msra.mxu0 0.0
      %1961 = vmatpush.msra.mxu0 0.0
      %1962 = vmatpush.msra.mxu0 0.0
      %1963 = vmatpush.msra.mxu0 0.0
      %1964 = vmatpush.msra.mxu0 0.0
      %1965 = vmatpush.msra.mxu0 0.0
      %1966 = vmatpush.msra.mxu0 0.0
      %1967 = vmatpush.msra.mxu0 0.0
      %1968 = vmatpush.msra.mxu0 0.0
      %1969 = vmatpush.msra.mxu0 %v1907
      %1970 = vmatpush.msra.mxu0 %v1906
      %1971 = vmatpush.msra.mxu0 %v1905
      %1972 = vmatpush.msra.mxu0 %v1904
      %1973 = vmatmul.f32.gmra.mxu0 %v1955
      %v1974 = vpop.f32.mrf.mxu0
      %v1975 = vadd.f32 0.0, %v1974
      %1976 = vdwg.mxu0
      %v1977 = vadd.f32 %v1952, %v1975
      %v1978 = vld [vmem:[%s17] sm:$0x1]
      %v1979 = vadd.f32 %v1977, %v1978
      %vm1980 = vcmask 253952
      %1981 = vst.msk [vmem:[%s623] sm:$0x1] %vm1980, %v1892
      %1982 = vst.msk [vmem:[%s623 + $0x1] sm:$0x1] %vm1980, %v1893
      %vm1983 = vcmask 16384
      %1984 = vst.msk [vmem:[%s626] sm:$0x1] %vm1983, %v1979
      %p1985 = scmp.lt.s32.totalorder %s31, 1
      %s1986 = scalar_select %p1985, %s31, 1
      %s1987 = smul.addr %s1986, 2
      %s1988 = scalar_lea.vmem %s18, %s1987
      %p1989 = scmp.lt.s32.totalorder %s31, 1
      %s1990 = scalar_select %p1989, %s31, 1
      %s1991 = scalar_lea.vmem %s19, %s1990
      // Predicated region
      $region93: #{siamese_bert_forward.1} parent=91 // pred_check
        %p1992 = pneg %p437
      $region94: #{siamese_bert_forward.1} parent=91 // pred_check_branch
        %1994 = sbr.rel (%p1992) target = $region96
      $region95: #{siamese_bert_forward.1} parent=91 // pred_region
        _
      $region96: #{siamese_bert_forward.1} parent=91 // pred_fallthru
        _
      // Predicated region
      $region97: #{siamese_bert_forward.1} parent=91 // pred_check
        %p1995 = pneg %p463
      $region98: #{siamese_bert_forward.1} parent=91 // pred_check_branch
        %1997 = sbr.rel (%p1995) target = $region100
      $region99: #{siamese_bert_forward.1} parent=91 // pred_region
        _
      $region100: #{siamese_bert_forward.1} parent=91 // pred_fallthru
        _
    $region92: #{siamese_bert_forward.1} parent=5 // pred_fallthru
      _
    %p1998 = scmp.le.s32.totalorder 2, %s26
    // Predicated region
    $region101: #{siamese_bert_forward.1} parent=5 // pred_check
      %p1999 = pneg %p1998
    $region102: #{siamese_bert_forward.1} parent=5 // pred_check_branch
      %2001 = sbr.rel (%p1999) target = $region104
    $region103: #{siamese_bert_forward.1} parent=5 // pred_region
      %s2002 = ssub.s32 %s26, 2
      // Predicated region
      $region105: #{siamese_bert_forward.1} parent=103 // pred_check
        %p2003 = pneg %p443
      $region106: #{siamese_bert_forward.1} parent=103 // pred_check_branch
        %2005 = sbr.rel (%p2003) target = $region108
      $region107: #{siamese_bert_forward.1} parent=103 // pred_region
        %p2006 = scmp.lt.s32.totalorder %s32, 1
        %s2007 = scalar_select %p2006, %s32, 1
        %s2008 = smul.addr %s2007, 2
        %s2009 = scalar_lea.vmem %s18, %s2008
      $region108: #{siamese_bert_forward.1} parent=103 // pred_fallthru
        _
      // Predicated region
      $region109: #{siamese_bert_forward.1} parent=103 // pred_check
        %p2010 = pneg %p469
      $region110: #{siamese_bert_forward.1} parent=103 // pred_check_branch
        %2012 = sbr.rel (%p2010) target = $region112
      $region111: #{siamese_bert_forward.1} parent=103 // pred_region
        %p2013 = scmp.lt.s32.totalorder %s32, 1
        %s2014 = scalar_select %p2013, %s32, 1
        %s2015 = scalar_lea.vmem %s19, %s2014
      $region112: #{siamese_bert_forward.1} parent=103 // pred_fallthru
        _
    $region104: #{siamese_bert_forward.1} parent=5 // pred_fallthru
      _
  $region6: #{siamese_bert_forward.1} parent=0 // loop_footer
    %s30 = sadd.s32 1, %s26
  $region7: #{siamese_bert_forward.1} parent=0 // loop_footer_branch
    %25 = sbr.rel target = $region3
  $region8: #{siamese_bert_forward.1} parent=0 // loop_exit
    _

</llo_original>
